<compile_context>
chip_gen: v7x
topology: tpu7x:2x2x1
jax: 0.10.0
libtpu: 0.0.40
codegen_flags: <defaults>
</compile_context>

<pallas_src>
import jax
import jax.numpy as jnp
from jax.experimental import pallas as pl
from jax.experimental.pallas import tpu as pltpu

F_PAD = 128              # lane-dense padded feature width used for every layer
DEFAULT_ROW_TILE = 512   # streaming-path row tile (>=512 rows ~ HBM roofline)


def _round_up(v, m):
    return ((v + m - 1) // m) * m


def _vmem_limit_bytes():
    """Generation-aware VMEM budget: ~85% of physical, capped at 100 MiB.
    (v5e/v6e have 128 MiB physical VMEM, v7x only 64 MiB.)"""
    try:
        cap = int(pltpu.get_tpu_info().vmem_capacity_bytes)
    except Exception:
        cap = 64 * 1024 * 1024  # conservative (v7x-sized) fallback
    return max(32 * 1024 * 1024, min(int(cap * 0.85), 100 * 1024 * 1024))


# ---------------------------------------------------------------------------
# Resident-A fused kernel: grid=(num_layers,), A / x / output stay resident in
# VMEM, inter-layer features live in a bf16 scratch slab.  Per layer:
#   agg = A @ x                      (mean aggregation, bf16 MXU, f32 acc)
#   h   = agg @ Wl_T + x @ Wr_T + b  (two K=128 passes on static W slices)
#   x   = relu(h)  (bf16 slab)  on all but the last layer; last layer -> o_ref
# ---------------------------------------------------------------------------
def _fused_sage_kernel(a_ref, x_ref, w_ref, b_ref, o_ref, feat_ref):
    layer = pl.program_id(0)
    num_layers = pl.num_programs(0)

    @pl.when(layer == 0)
    def _():
        feat_ref[...] = x_ref[...]                # seed bf16 feature slab

    x_in = feat_ref[...]                          # [n_pad, F_PAD] bf16
    agg = jnp.dot(a_ref[...], x_in, preferred_element_type=jnp.float32)

    h = (jnp.dot(agg.astype(jnp.bfloat16), w_ref[:F_PAD, :],
                 preferred_element_type=jnp.float32)
         + jnp.dot(x_in, w_ref[F_PAD:, :],
                   preferred_element_type=jnp.float32)
         + b_ref[...])

    @pl.when(layer < num_layers - 1)
    def _():
        feat_ref[...] = jnp.maximum(h, 0.0).astype(jnp.bfloat16)

    @pl.when(layer == num_layers - 1)
    def _():
        o_ref[...] = h


def _forward_resident(a_pad, x_pad, w_all, b_all, n_pad, num_layers,
                      vmem_limit, single_buffer):
    def spec(shape, imap):
        if single_buffer:
            return pl.BlockSpec(shape, imap, pipeline_mode=pl.Buffered(1))
        return pl.BlockSpec(shape, imap)

    return pl.pallas_call(
        _fused_sage_kernel,
        out_shape=jax.ShapeDtypeStruct((n_pad, F_PAD), jnp.float32),
        grid=(num_layers,),
        in_specs=[
            spec((n_pad, n_pad), lambda l: (0, 0)),                       # A (resident)
            spec((n_pad, F_PAD), lambda l: (0, 0)),                       # x (read once)
            pl.BlockSpec((None, 2 * F_PAD, F_PAD), lambda l: (l, 0, 0)),  # W per layer
            pl.BlockSpec((None, 1, F_PAD), lambda l: (l, 0, 0)),          # b per layer
        ],
        out_specs=spec((n_pad, F_PAD), lambda l: (0, 0)),                 # written once
        scratch_shapes=[pltpu.VMEM((n_pad, F_PAD), jnp.bfloat16)],        # feature slab
        compiler_params=pltpu.CompilerParams(
            dimension_semantics=("arbitrary",),      # layers are sequential
            vmem_limit_bytes=vmem_limit,
        ),
    )(a_pad, x_pad, w_all, b_all)


# ---------------------------------------------------------------------------
# Row-tiled streaming path: grid=(num_layers, n_pad//tn), layers outer.
# A is streamed (tn, n_pad) per step; a ping-pong pair of bf16 feature slabs
# (flattened to one (2*n_pad, F_PAD) scratch) holds the previous / current
# layer's features.  Decouples VMEM from N^2 and pipelines the A DMA.
# ---------------------------------------------------------------------------
def _forward_tiled(a_pad, x_pad, w_all, b_all, n_pad, num_layers, tn, vmem_limit):
    def kernel(a_ref, x_ref, w_ref, b_ref, o_ref, feat_ref):
        layer = pl.program_id(0)
        row = pl.program_id(1)
        num_layers_ = pl.num_programs(0)

        # Seed the layer-0 "read" slab (second half of the scratch) once.
        @pl.when((layer == 0) & (row == 0))
        def _():
            feat_ref[pl.ds(n_pad, n_pad), :] = x_ref[...]

        rd_base = pl.multiple_of(((layer + 1) & 1) * n_pad, tn)       # read slab
        wr_off = pl.multiple_of((layer & 1) * n_pad + row * tn, tn)   # write rows

        x_full = feat_ref[pl.ds(rd_base, n_pad), :]                   # [n_pad, F] bf16
        x_tile = feat_ref[pl.ds(rd_base + row * tn, tn), :]           # [tn, F]    bf16

        agg = jnp.dot(a_ref[...], x_full, preferred_element_type=jnp.float32)
        h = (jnp.dot(agg.astype(jnp.bfloat16), w_ref[:F_PAD, :],
                     preferred_element_type=jnp.float32)
             + jnp.dot(x_tile, w_ref[F_PAD:, :],
                       preferred_element_type=jnp.float32)
             + b_ref[...])

        @pl.when(layer < num_layers_ - 1)
        def _():
            feat_ref[pl.ds(wr_off, tn), :] = jnp.maximum(h, 0.0).astype(jnp.bfloat16)

        @pl.when(layer == num_layers_ - 1)
        def _():
            o_ref[...] = h

    n_rows = n_pad // tn
    return pl.pallas_call(
        kernel,
        out_shape=jax.ShapeDtypeStruct((n_pad, F_PAD), jnp.float32),
        grid=(num_layers, n_rows),
        in_specs=[
            pl.BlockSpec((tn, n_pad), lambda l, r: (r, 0)),                  # A row stream
            pl.BlockSpec((n_pad, F_PAD), lambda l, r: (0, 0)),               # x (seed only)
            pl.BlockSpec((None, 2 * F_PAD, F_PAD), lambda l, r: (l, 0, 0)),  # W per layer
            pl.BlockSpec((None, 1, F_PAD), lambda l, r: (l, 0, 0)),          # b per layer
        ],
        out_specs=pl.BlockSpec((tn, F_PAD), lambda l, r: (r, 0)),
        scratch_shapes=[pltpu.VMEM((2 * n_pad, F_PAD), jnp.bfloat16)],       # ping-pong slabs
        compiler_params=pltpu.CompilerParams(
            # TODO(synk): on v7x, shard the row axis across the two TensorCores via
            # core_map + core_barrier between layers (plain "parallel" would break the
            # cross-core ping-pong feature-slab dependency, since scratch is per-core).
            dimension_semantics=("arbitrary", "arbitrary"),
            vmem_limit_bytes=vmem_limit,
        ),
    )(a_pad, x_pad, w_all, b_all)


# ---------------------------------------------------------------------------
# Glue: edge_index -> dense, padded, row-normalized mean-aggregation matrix in
# one pass (A[i, j] = 1/deg_in(i) for every edge j -> i; padded rows/cols zero).
# ---------------------------------------------------------------------------
def build_mean_aggregation_matrix(edge_index, num_nodes, n_pad=None):
    n_pad = num_nodes if n_pad is None else n_pad
    src = edge_index[0]
    dst = edge_index[1]
    adj = jnp.zeros((n_pad, n_pad), jnp.float32).at[dst, src].add(1.0)
    deg = adj.sum(axis=1, keepdims=True)
    # Rows with deg == 0 are all-zero, so dividing by max(deg, 1) is exact.
    return (adj / jnp.maximum(deg, 1.0)).astype(jnp.bfloat16)
    # TODO(synk): for large sparse graphs replace this dense O(N^2) matrix with a
    # CSR neighbor-list gather (PrefetchScalarGridSpec-driven DMA of neighbor rows).


# ---------------------------------------------------------------------------
# Parameters: deterministic init + packing into padded / fused slabs
# ---------------------------------------------------------------------------
def init_params(key, in_channels, hidden_channels, out_channels, num_layers=3):
    dims = ([(in_channels, hidden_channels)]
            + [(hidden_channels, hidden_channels)] * (num_layers - 2)
            + [(hidden_channels, out_channels)])
    params = []
    for d_in, d_out in dims:
        key, k1, k2, k3 = jax.random.split(key, 4)
        scale = 1.0 / jnp.sqrt(d_in)
        wl_t = jax.random.uniform(k1, (d_in, d_out), jnp.float32, -scale, scale)
        wr_t = jax.random.uniform(k2, (d_in, d_out), jnp.float32, -scale, scale)
        b = jax.random.uniform(k3, (1, d_out), jnp.float32, -scale, scale)
        params.append((wl_t, wr_t, b))
    return params


def pack_params(params, f_pad=F_PAD):
    """Zero-pad each layer's Wl_T/Wr_T/b to F_PAD lanes; stack Wl/Wr along K so the
    kernel can use static slices W[:F_PAD] (neigh) and W[F_PAD:] (self)."""
    w_list, b_list = [], []
    for wl_t, wr_t, b in params:
        d_in, d_out = wl_t.shape
        assert d_in <= f_pad and d_out <= f_pad
        w = jnp.zeros((2 * f_pad, f_pad), jnp.float32)
        w = w.at[:d_in, :d_out].set(wl_t)
        w = w.at[f_pad:f_pad + d_in, :d_out].set(wr_t)
        w_list.append(w)
        b_list.append(jnp.zeros((1, f_pad), jnp.float32).at[:, :d_out].set(b))
    w_all = jnp.stack(w_list).astype(jnp.bfloat16)   # [L, 2*F_PAD, F_PAD] bf16
    b_all = jnp.stack(b_list)                        # [L, 1, F_PAD]       f32
    return w_all, b_all


# ---------------------------------------------------------------------------
# Forward: pad once, pick resident vs row-tiled path, run one pallas_call, slice.
# ---------------------------------------------------------------------------
def graphsage_forward(params, x, edge_index, edge_attr=None, row_tile=None):
    del edge_attr  # SAGEConv ignores edge_attr, matching the PyTorch forward.
    n, in_c = x.shape
    out_c = params[-1][0].shape[1]
    num_layers = len(params)
    vmem_limit = _vmem_limit_bytes()

    # Resident-A path VMEM estimate: A bf16 (single-buffered) + x/feat bf16 +
    # out f32 + per-layer weights (double-buffered) + slack.
    n_pad_res = _round_up(max(n, 1), 128)
    resident_bytes = (2 * n_pad_res * n_pad_res
                      + 8 * n_pad_res * F_PAD
                      + num_layers * 2 * (2 * F_PAD * F_PAD * 2 + F_PAD * 4)
                      + (1 << 20))
    use_resident = (row_tile is None) and (resident_bytes <= int(0.6 * vmem_limit))

    if use_resident:
        n_pad, tn = n_pad_res, None
    else:
        tn = int(row_tile) if row_tile is not None else DEFAULT_ROW_TILE
        tn = max(128, _round_up(tn, 128))
        n_pad = _round_up(max(n, 1), tn)
        tn = min(tn, n_pad)

    a_pad = build_mean_aggregation_matrix(edge_index, n, n_pad)       # bf16 [n_pad, n_pad]
    x_pad = (jnp.zeros((n_pad, F_PAD), jnp.float32)
             .at[:n, :in_c].set(x).astype(jnp.bfloat16))
    w_all, b_all = pack_params(params)

    if use_resident:
        try:
            out_pad = _forward_resident(a_pad, x_pad, w_all, b_all, n_pad,
                                        num_layers, vmem_limit, single_buffer=True)
            out_pad = jax.block_until_ready(out_pad)
        except Exception:
            # Fallback for JAX versions without Buffered(1) grid-pipelining support.
            out_pad = _forward_resident(a_pad, x_pad, w_all, b_all, n_pad,
                                        num_layers, vmem_limit, single_buffer=False)
    else:
        out_pad = _forward_tiled(a_pad, x_pad, w_all, b_all, n_pad,
                                 num_layers, tn, vmem_limit)

    return out_pad[:n, :out_c]


# ---------------------------------------------------------------------------
# Pure-JAX reference with the same bf16-matmul / f32-accumulate recipe
# ---------------------------------------------------------------------------
def graphsage_reference(params, x, edge_index):
    n = x.shape[0]
    a = build_mean_aggregation_matrix(edge_index, n)                  # bf16 [n, n]
    h = x
    num_layers = len(params)
    for i, (wl_t, wr_t, b) in enumerate(params):
        x_in = h.astype(jnp.bfloat16)
        agg = jnp.dot(a, x_in, preferred_element_type=jnp.float32)
        h = (jnp.dot(agg.astype(jnp.bfloat16), wl_t.astype(jnp.bfloat16),
                     preferred_element_type=jnp.float32)
             + jnp.dot(x_in, wr_t.astype(jnp.bfloat16),
                       preferred_element_type=jnp.float32)
             + b)
        if i < num_layers - 1:
            h = jnp.maximum(h, 0.0)
    return h


if __name__ == "__main__":
    key = jax.random.PRNGKey(0)
    k_x, k_e, k_attr, k_p, k_x2, k_e2 = jax.random.split(key, 6)

    IN_C, HID_C, OUT_C = 16, 32, 8
    params = init_params(k_p, IN_C, HID_C, OUT_C, num_layers=3)

    # Small graph -> resident-A fused path.
    N, E = 64, 256
    x = jax.random.normal(k_x, (N, IN_C), jnp.float32)
    edge_index = jax.random.randint(k_e, (2, E), 0, N, jnp.int32)
    edge_attr = jax.random.normal(k_attr, (E, 4), jnp.float32)  # unused, as in PyTorch

    out = jax.block_until_ready(graphsage_forward(params, x, edge_index, edge_attr))
    ref = graphsage_reference(params, x, edge_index)
    assert out.shape == (N, OUT_C), out.shape
    assert jnp.allclose(out, ref, atol=2e-2, rtol=2e-2), float(jnp.max(jnp.abs(out - ref)))

    # Larger graph with a forced small row tile -> exercises the streaming path.
    N2, E2 = 300, 1200
    x2 = jax.random.normal(k_x2, (N2, IN_C), jnp.float32)
    edge_index2 = jax.random.randint(k_e2, (2, E2), 0, N2, jnp.int32)
    out2 = jax.block_until_ready(
        graphsage_forward(params, x2, edge_index2, None, row_tile=128))
    ref2 = graphsage_reference(params, x2, edge_index2)
    assert out2.shape == (N2, OUT_C), out2.shape
    assert jnp.allclose(out2, ref2, atol=2e-2, rtol=2e-2), float(jnp.max(jnp.abs(out2 - ref2)))

    print("KERNEL_OK")
</pallas_src>

<mosaic_0001>
module attributes {stable_mosaic.version = 11 : i64} {
  func.func @_fused_sage_kernel(%arg0: i32, %arg1: memref<128x128xbf16, #tpu.memory_space<vmem>>, %arg2: memref<128x128xbf16, #tpu.memory_space<vmem>>, %arg3: memref<1x256x128xbf16, #tpu.memory_space<vmem>>, %arg4: memref<1x1x128xf32, #tpu.memory_space<vmem>>, %arg5: memref<128x128xf32, #tpu.memory_space<vmem>>, %arg6: memref<128x128xbf16, #tpu.memory_space<vmem>>) attributes {dimension_semantics = [#tpu.dimension_semantics<arbitrary>], iteration_bounds = array<i64: 3>, scalar_prefetch = 0 : i64, scratch_operands = 1 : i64, tpu.core_type = #tpu.core_type<tc>, window_params = [{pipeline_mode = #tpu.pipeline_mode<synchronous>, transform_indices = @transform_0, window_bounds = array<i64: 128, 128>}, {pipeline_mode = #tpu.pipeline_mode<synchronous>, transform_indices = @transform_1, window_bounds = array<i64: 128, 128>}, {transform_indices = @transform_2, window_bounds = array<i64: 1, 256, 128>}, {transform_indices = @transform_3, window_bounds = array<i64: 1, 1, 128>}, {pipeline_mode = #tpu.pipeline_mode<synchronous>, transform_indices = @transform_4, window_bounds = array<i64: 128, 128>}]} {
    %c0_i32 = arith.constant 0 : i32
    %0 = arith.cmpi eq, %arg0, %c0_i32 : i32
    %1 = arith.extui %0 : i1 to i32
    %c0_i32_0 = arith.constant 0 : i32
    %2 = arith.cmpi ne, %1, %c0_i32_0 : i32
    scf.if %2 {
      %c0_17 = arith.constant 0 : index
      %c0_18 = arith.constant 0 : index
      %24 = vector.load %arg2[%c0_17, %c0_18] : memref<128x128xbf16, #tpu.memory_space<vmem>>, vector<128x128xbf16>
      %c0_19 = arith.constant 0 : index
      %c0_20 = arith.constant 0 : index
      %25 = vector.load %arg6[%c0_19, %c0_20] : memref<128x128xbf16, #tpu.memory_space<vmem>>, vector<128x128xbf16>
      tpu.vector_store %arg6[%c0_19, %c0_20], %24 {strides = array<i32>} : memref<128x128xbf16, #tpu.memory_space<vmem>>, vector<128x128xbf16>,
    } else {
    }
    %c0 = arith.constant 0 : index
    %c0_1 = arith.constant 0 : index
    %3 = vector.load %arg6[%c0, %c0_1] : memref<128x128xbf16, #tpu.memory_space<vmem>>, vector<128x128xbf16>
    %c0_2 = arith.constant 0 : index
    %c0_3 = arith.constant 0 : index
    %4 = vector.load %arg1[%c0_2, %c0_3] : memref<128x128xbf16, #tpu.memory_space<vmem>>, vector<128x128xbf16>
    %cst = arith.constant dense<0.000000e+00> : vector<128x128xf32>
    %5 = tpu.matmul %4, %3, %cst {dimension_numbers = #tpu.dot_dimension_numbers<[1], [0], [0], [1], [0, 0, 1, 1], [], []>} : vector<128x128xbf16>, vector<128x128xbf16>, vector<128x128xf32> -> vector<128x128xf32>
    %6 = arith.truncf %5 : vector<128x128xf32> to vector<128x128xbf16>
    %c0_4 = arith.constant 0 : index
    %c0_5 = arith.constant 0 : index
    %c0_6 = arith.constant 0 : index
    %7 = vector.load %arg3[%c0_4, %c0_5, %c0_6] : memref<1x256x128xbf16, #tpu.memory_space<vmem>>, vector<1x128x128xbf16>
    %8 = vector.shape_cast %7 : vector<1x128x128xbf16> to vector<128x128xbf16>
    %cst_7 = arith.constant dense<0.000000e+00> : vector<128x128xf32>
    %9 = tpu.matmul %6, %8, %cst_7 {dimension_numbers = #tpu.dot_dimension_numbers<[1], [0], [0], [1], [0, 0, 1, 1], [], []>} : vector<128x128xbf16>, vector<128x128xbf16>, vector<128x128xf32> -> vector<128x128xf32>
    %c0_8 = arith.constant 0 : index
    %c128 = arith.constant 128 : index
    %c0_9 = arith.constant 0 : index
    %10 = vector.load %arg3[%c0_8, %c128, %c0_9] : memref<1x256x128xbf16, #tpu.memory_space<vmem>>, vector<1x128x128xbf16>
    %11 = vector.shape_cast %10 : vector<1x128x128xbf16> to vector<128x128xbf16>
    %cst_10 = arith.constant dense<0.000000e+00> : vector<128x128xf32>
    %12 = tpu.matmul %3, %11, %cst_10 {dimension_numbers = #tpu.dot_dimension_numbers<[1], [0], [0], [1], [0, 0, 1, 1], [], []>} : vector<128x128xbf16>, vector<128x128xbf16>, vector<128x128xf32> -> vector<128x128xf32>
    %13 = arith.addf %9, %12 : vector<128x128xf32>
    %c0_11 = arith.constant 0 : index
    %c0_12 = arith.constant 0 : index
    %c0_13 = arith.constant 0 : index
    %14 = vector.load %arg4[%c0_11, %c0_12, %c0_13] : memref<1x1x128xf32, #tpu.memory_space<vmem>>, vector<1x1x128xf32>
    %15 = vector.shape_cast %14 : vector<1x1x128xf32> to vector<1x128xf32>
    %16 = vector.broadcast %15 : vector<1x128xf32> to vector<128x128xf32>
    %17 = arith.addf %13, %16 : vector<128x128xf32>
    %c2_i32 = arith.constant 2 : i32
    %18 = arith.cmpi slt, %arg0, %c2_i32 : i32
    %19 = arith.extui %18 : i1 to i32
    %c0_i32_14 = arith.constant 0 : i32
    %20 = arith.cmpi ne, %19, %c0_i32_14 : i32
    scf.if %20 {
      %cst_17 = arith.constant 0.000000e+00 : f32
      %24 = vector.broadcast %cst_17 : f32 to vector<128x128xf32>
      %25 = arith.maximumf %17, %24 : vector<128x128xf32>
      %26 = arith.truncf %25 : vector<128x128xf32> to vector<128x128xbf16>
      %c0_18 = arith.constant 0 : index
      %c0_19 = arith.constant 0 : index
      %27 = vector.load %arg6[%c0_18, %c0_19] : memref<128x128xbf16, #tpu.memory_space<vmem>>, vector<128x128xbf16>
      tpu.vector_store %arg6[%c0_18, %c0_19], %26 {strides = array<i32>} : memref<128x128xbf16, #tpu.memory_space<vmem>>, vector<128x128xbf16>,
    } else {
    }
    %c2_i32_15 = arith.constant 2 : i32
    %21 = arith.cmpi eq, %arg0, %c2_i32_15 : i32
    %22 = arith.extui %21 : i1 to i32
    %c0_i32_16 = arith.constant 0 : i32
    %23 = arith.cmpi ne, %22, %c0_i32_16 : i32
    scf.if %23 {
      %c0_17 = arith.constant 0 : index
      %c0_18 = arith.constant 0 : index
      %24 = vector.load %arg5[%c0_17, %c0_18] : memref<128x128xf32, #tpu.memory_space<vmem>>, vector<128x128xf32>
      tpu.vector_store %arg5[%c0_17, %c0_18], %17 {strides = array<i32>} : memref<128x128xf32, #tpu.memory_space<vmem>>, vector<128x128xf32>,
    } else {
    }
    return
  }
  func.func @transform_0(%arg0: i32) -> (i32, i32) {
    %c0_i32 = arith.constant 0 : i32
    %c0_i32_0 = arith.constant 0 : i32
    %c0_i32_1 = arith.constant 0 : i32
    return %c0_i32, %c0_i32_0 : i32, i32
  }
  func.func @transform_1(%arg0: i32) -> (i32, i32) {
    %c0_i32 = arith.constant 0 : i32
    %c0_i32_0 = arith.constant 0 : i32
    %c0_i32_1 = arith.constant 0 : i32
    return %c0_i32, %c0_i32_0 : i32, i32
  }
  func.func @transform_2(%arg0: i32) -> (i32, i32, i32) {
    %c0_i32 = arith.constant 0 : i32
    %c0_i32_0 = arith.constant 0 : i32
    %c0_i32_1 = arith.constant 0 : i32
    return %arg0, %c0_i32, %c0_i32_0 : i32, i32, i32
  }
  func.func @transform_3(%arg0: i32) -> (i32, i32, i32) {
    %c0_i32 = arith.constant 0 : i32
    %c0_i32_0 = arith.constant 0 : i32
    %c0_i32_1 = arith.constant 0 : i32
    return %arg0, %c0_i32, %c0_i32_0 : i32, i32, i32
  }
  func.func @transform_4(%arg0: i32) -> (i32, i32) {
    %c0_i32 = arith.constant 0 : i32
    %c0_i32_0 = arith.constant 0 : i32
    %c0_i32_1 = arith.constant 0 : i32
    return %c0_i32, %c0_i32_0 : i32, i32
  }
}

module attributes {stable_mosaic.version = 11 : i64} {
  func.func @_fused_sage_kernel(%arg0: i32, %arg1: memref<128x128xbf16, #tpu.memory_space<vmem>>, %arg2: memref<128x128xbf16, #tpu.memory_space<vmem>>, %arg3: memref<1x256x128xbf16, #tpu.memory_space<vmem>>, %arg4: memref<1x1x128xf32, #tpu.memory_space<vmem>>, %arg5: memref<128x128xf32, #tpu.memory_space<vmem>>, %arg6: memref<128x128xbf16, #tpu.memory_space<vmem>>) attributes {dimension_semantics = [#tpu.dimension_semantics<arbitrary>], iteration_bounds = array<i64: 3>, scalar_prefetch = 0 : i64, scratch_operands = 1 : i64, tpu.core_type = #tpu.core_type<tc>, window_params = [{pipeline_mode = #tpu.pipeline_mode<synchronous>, transform_indices = @transform_0, window_bounds = array<i64: 128, 128>}, {pipeline_mode = #tpu.pipeline_mode<synchronous>, transform_indices = @transform_1, window_bounds = array<i64: 128, 128>}, {transform_indices = @transform_2, window_bounds = array<i64: 1, 256, 128>}, {transform_indices = @transform_3, window_bounds = array<i64: 1, 1, 128>}, {pipeline_mode = #tpu.pipeline_mode<synchronous>, transform_indices = @transform_4, window_bounds = array<i64: 128, 128>}]} {
    %c0_i32 = arith.constant 0 : i32
    %0 = arith.cmpi eq, %arg0, %c0_i32 : i32
    %1 = arith.extui %0 : i1 to i32
    %c0_i32_0 = arith.constant 0 : i32
    %2 = arith.cmpi ne, %1, %c0_i32_0 : i32
    scf.if %2 {
      %c0_17 = arith.constant 0 : index
      %c0_18 = arith.constant 0 : index
      %24 = vector.load %arg2[%c0_17, %c0_18] : memref<128x128xbf16, #tpu.memory_space<vmem>>, vector<128x128xbf16>
      %c0_19 = arith.constant 0 : index
      %c0_20 = arith.constant 0 : index
      %25 = vector.load %arg6[%c0_19, %c0_20] : memref<128x128xbf16, #tpu.memory_space<vmem>>, vector<128x128xbf16>
      tpu.vector_store %arg6[%c0_19, %c0_20], %24 {strides = array<i32>} : memref<128x128xbf16, #tpu.memory_space<vmem>>, vector<128x128xbf16>,
    } else {
    }
    %c0 = arith.constant 0 : index
    %c0_1 = arith.constant 0 : index
    %3 = vector.load %arg6[%c0, %c0_1] : memref<128x128xbf16, #tpu.memory_space<vmem>>, vector<128x128xbf16>
    %c0_2 = arith.constant 0 : index
    %c0_3 = arith.constant 0 : index
    %4 = vector.load %arg1[%c0_2, %c0_3] : memref<128x128xbf16, #tpu.memory_space<vmem>>, vector<128x128xbf16>
    %cst = arith.constant dense<0.000000e+00> : vector<128x128xf32>
    %5 = tpu.matmul %4, %3, %cst {dimension_numbers = #tpu.dot_dimension_numbers<[1], [0], [0], [1], [0, 0, 1, 1], [], []>} : vector<128x128xbf16>, vector<128x128xbf16>, vector<128x128xf32> -> vector<128x128xf32>
    %6 = arith.truncf %5 : vector<128x128xf32> to vector<128x128xbf16>
    %c0_4 = arith.constant 0 : index
    %c0_5 = arith.constant 0 : index
    %c0_6 = arith.constant 0 : index
    %7 = vector.load %arg3[%c0_4, %c0_5, %c0_6] : memref<1x256x128xbf16, #tpu.memory_space<vmem>>, vector<1x128x128xbf16>
    %8 = vector.shape_cast %7 : vector<1x128x128xbf16> to vector<128x128xbf16>
    %cst_7 = arith.constant dense<0.000000e+00> : vector<128x128xf32>
    %9 = tpu.matmul %6, %8, %cst_7 {dimension_numbers = #tpu.dot_dimension_numbers<[1], [0], [0], [1], [0, 0, 1, 1], [], []>} : vector<128x128xbf16>, vector<128x128xbf16>, vector<128x128xf32> -> vector<128x128xf32>
    %c0_8 = arith.constant 0 : index
    %c128 = arith.constant 128 : index
    %c0_9 = arith.constant 0 : index
    %10 = vector.load %arg3[%c0_8, %c128, %c0_9] : memref<1x256x128xbf16, #tpu.memory_space<vmem>>, vector<1x128x128xbf16>
    %11 = vector.shape_cast %10 : vector<1x128x128xbf16> to vector<128x128xbf16>
    %cst_10 = arith.constant dense<0.000000e+00> : vector<128x128xf32>
    %12 = tpu.matmul %3, %11, %cst_10 {dimension_numbers = #tpu.dot_dimension_numbers<[1], [0], [0], [1], [0, 0, 1, 1], [], []>} : vector<128x128xbf16>, vector<128x128xbf16>, vector<128x128xf32> -> vector<128x128xf32>
    %13 = arith.addf %9, %12 : vector<128x128xf32>
    %c0_11 = arith.constant 0 : index
    %c0_12 = arith.constant 0 : index
    %c0_13 = arith.constant 0 : index
    %14 = vector.load %arg4[%c0_11, %c0_12, %c0_13] : memref<1x1x128xf32, #tpu.memory_space<vmem>>, vector<1x1x128xf32>
    %15 = vector.shape_cast %14 : vector<1x1x128xf32> to vector<1x128xf32>
    %16 = vector.broadcast %15 : vector<1x128xf32> to vector<128x128xf32>
    %17 = arith.addf %13, %16 : vector<128x128xf32>
    %c2_i32 = arith.constant 2 : i32
    %18 = arith.cmpi slt, %arg0, %c2_i32 : i32
    %19 = arith.extui %18 : i1 to i32
    %c0_i32_14 = arith.constant 0 : i32
    %20 = arith.cmpi ne, %19, %c0_i32_14 : i32
    scf.if %20 {
      %cst_17 = arith.constant 0.000000e+00 : f32
      %24 = vector.broadcast %cst_17 : f32 to vector<128x128xf32>
      %25 = arith.maximumf %17, %24 : vector<128x128xf32>
      %26 = arith.truncf %25 : vector<128x128xf32> to vector<128x128xbf16>
      %c0_18 = arith.constant 0 : index
      %c0_19 = arith.constant 0 : index
      %27 = vector.load %arg6[%c0_18, %c0_19] : memref<128x128xbf16, #tpu.memory_space<vmem>>, vector<128x128xbf16>
      tpu.vector_store %arg6[%c0_18, %c0_19], %26 {strides = array<i32>} : memref<128x128xbf16, #tpu.memory_space<vmem>>, vector<128x128xbf16>,
    } else {
    }
    %c2_i32_15 = arith.constant 2 : i32
    %21 = arith.cmpi eq, %arg0, %c2_i32_15 : i32
    %22 = arith.extui %21 : i1 to i32
    %c0_i32_16 = arith.constant 0 : i32
    %23 = arith.cmpi ne, %22, %c0_i32_16 : i32
    scf.if %23 {
      %c0_17 = arith.constant 0 : index
      %c0_18 = arith.constant 0 : index
      %24 = vector.load %arg5[%c0_17, %c0_18] : memref<128x128xf32, #tpu.memory_space<vmem>>, vector<128x128xf32>
      tpu.vector_store %arg5[%c0_17, %c0_18], %17 {strides = array<i32>} : memref<128x128xf32, #tpu.memory_space<vmem>>, vector<128x128xf32>,
    } else {
    }
    return
  }
  func.func @transform_0(%arg0: i32) -> (i32, i32) {
    %c0_i32 = arith.constant 0 : i32
    %c0_i32_0 = arith.constant 0 : i32
    %c0_i32_1 = arith.constant 0 : i32
    return %c0_i32, %c0_i32_0 : i32, i32
  }
  func.func @transform_1(%arg0: i32) -> (i32, i32) {
    %c0_i32 = arith.constant 0 : i32
    %c0_i32_0 = arith.constant 0 : i32
    %c0_i32_1 = arith.constant 0 : i32
    return %c0_i32, %c0_i32_0 : i32, i32
  }
  func.func @transform_2(%arg0: i32) -> (i32, i32, i32) {
    %c0_i32 = arith.constant 0 : i32
    %c0_i32_0 = arith.constant 0 : i32
    %c0_i32_1 = arith.constant 0 : i32
    return %arg0, %c0_i32, %c0_i32_0 : i32, i32, i32
  }
  func.func @transform_3(%arg0: i32) -> (i32, i32, i32) {
    %c0_i32 = arith.constant 0 : i32
    %c0_i32_0 = arith.constant 0 : i32
    %c0_i32_1 = arith.constant 0 : i32
    return %arg0, %c0_i32, %c0_i32_0 : i32, i32, i32
  }
  func.func @transform_4(%arg0: i32) -> (i32, i32) {
    %c0_i32 = arith.constant 0 : i32
    %c0_i32_0 = arith.constant 0 : i32
    %c0_i32_1 = arith.constant 0 : i32
    return %c0_i32, %c0_i32_0 : i32, i32
  }
}

</mosaic_0001>

<llo_original>
// kernel: tpu_custom_call.1
$region0: #{tpu_custom_call.1}
  #allocation0 [shape = 'u32[]', space=smem, size = 0x4, offset = 0x4, fixed_abs, tag = 'smem constant byte address 0x4 - core index']
  #allocation1 [shape = 'u32[144,128]{1,0:T(1,128)}', space=vmem, size = 0x12000, scoped, tag = 'internal scratch']
  #allocation2 [shape = 'bf16[128,128]{1,0:T(16,128)(2,1)}', space=vmem, size = 0x8000, scoped, tag = 'scratch operand']
  %s0 = inlined_call_operand.hbm [shape: bf16[128,128], index: 0, kind: input, shape index: {}]
  %s1 = inlined_call_operand.hbm [shape: bf16[128,128], index: 1, kind: input, shape index: {}]
  %s2 = inlined_call_operand.hbm [shape: bf16[3,256,128], index: 2, kind: input, shape index: {}]
  %s3 = inlined_call_operand.vmem [shape: f32[3,1,128], index: 3, kind: input, shape index: {}]
  %s4 = inlined_call_operand.hbm [shape: f32[128,128], index: 4, kind: output, shape index: {}]
  %s5 = sld [smem:[#allocation0]]
  $region73: #{tpu_custom_call.1} parent=0
    _
  %s7 = ssub.s32 1, %s5
  %s8 = scalar_select 0, %s7, %s5
  $region1: #{tpu_custom_call.1} parent=0
    #allocation3 [shape = 'u8[32768]{0}', space=vmem, size = 0x8000, scoped, tag = 'input window, operand 0, single buffered']
    #allocation4 [shape = 's32[2]{0}', space=sflag, size = 0x8, scoped, tag = 'scoped memory for tpu_custom_call.1']
    #allocation5 [shape = 's32[2]{0}', space=sflag, size = 0x8, scoped, tag = 'scoped memory for tpu_custom_call.1']
    #allocation6 [shape = 'u8[32768]{0}', space=vmem, size = 0x8000, scoped, tag = 'input window, operand 1, single buffered']
    #allocation7 [shape = 's32[1]{0}', space=sflag, size = 0x4, scoped, tag = 'scoped memory for tpu_custom_call.1']
    #allocation8 [shape = 'u8[131072]{0}', space=vmem, size = 0x20000, scoped, tag = 'input window, operand 2']
    #allocation9 [shape = 'u8[65536]{0}', space=vmem, size = 0x10000, scoped, tag = 'output window, operand 0, single buffered']
    %9 = vsyncpa [#allocation4], 0
    %10 = vsyncpa [#allocation7], 0
    %11 = vsyncpa [#allocation5], 0
    loop: start=0, step=1, limit=5
    $region2: #{tpu_custom_call.1} parent=1 // loop_pre_header
      _
    $region3: #{tpu_custom_call.1} parent=1 // loop_header
      %s13 = sphi 0, %s17
      %p14 = scmp.ge.s32.totalorder %s13, 5
      %s21 = sphi 0, %s21
      %s23 = sphi 0, %s21
      %s24 = sphi 0, %s23
      %s38 = sphi 0, %s24
      %s42 = sphi 0, %s42
      %s44 = sphi 0, %s42
      %s45 = sphi 0, %s44
      %s59 = sphi 0, %s45
      %s65 = sphi 0, %s67
      %s68 = sphi 0, %s65
      %s69 = sphi 0, %s68
      %s85 = sphi 0, %s69
      %s91 = sphi 0, %s93
      %s94 = sphi 0, %s91
      %s95 = sphi 0, %s94
      %s111 = sphi 0, %s95
      %s115 = sphi 0, %s115
      %s117 = sphi 0, %s115
      %s118 = sphi 0, %s117
      %s132 = sphi 0, %s118
    $region4: #{tpu_custom_call.1} parent=1 // loop_header_branch
      %16 = sbr.rel (%p14) target = $region8
    $region5: #{tpu_custom_call.1} parent=1 // loop_body
      %s18 = ssub.s32 %s13, 1
      %s19 = ssub.s32 %s13, 2
      %s20 = sadd.s32 %s13, 1
      %s22 = sadd.s32 %s21, 1
      %p25 = scmp.eq.s32.totalorder %s13, 2
      %p26 = scmp.ne.s32.totalorder %s21, %s23
      %p27 = scmp.eq.s32.totalorder %s13, 0
      %p28 = por %p26, %p27
      %p29 = scmp.ne.s32.totalorder %s21, %s23
      %p30 = scmp.eq.s32.totalorder %s18, 2
      %p31 = por %p29, %p30
      %p32 = scmp.ne.s32.totalorder %s23, %s24
      %p33 = scmp.eq.s32.totalorder %s18, 0
      %p34 = por %p32, %p33
      %p35 = scmp.ne.s32.totalorder %s23, %s24
      %p36 = scmp.eq.s32.totalorder %s19, 2
      %p37 = por %p35, %p36
      %p39 = scmp.ne.s32.totalorder %s24, %s38
      %p40 = scmp.eq.s32.totalorder %s19, 0
      %p41 = por %p39, %p40
      %s43 = sadd.s32 %s42, 1
      %p46 = scmp.eq.s32.totalorder %s13, 2
      %p47 = scmp.ne.s32.totalorder %s42, %s44
      %p48 = scmp.eq.s32.totalorder %s13, 0
      %p49 = por %p47, %p48
      %p50 = scmp.ne.s32.totalorder %s42, %s44
      %p51 = scmp.eq.s32.totalorder %s18, 2
      %p52 = por %p50, %p51
      %p53 = scmp.ne.s32.totalorder %s44, %s45
      %p54 = scmp.eq.s32.totalorder %s18, 0
      %p55 = por %p53, %p54
      %p56 = scmp.ne.s32.totalorder %s44, %s45
      %p57 = scmp.eq.s32.totalorder %s19, 2
      %p58 = por %p56, %p57
      %p60 = scmp.ne.s32.totalorder %s45, %s59
      %p61 = scmp.eq.s32.totalorder %s19, 0
      %p62 = por %p60, %p61
      %s63 = ssub.s32 %s13, %s20
      %p64 = scmp.eq.s32.totalorder %s63, 0
      %s66 = sadd.s32 %s65, 1
      %s67 = scalar_select %p64, %s65, %s66
      %p70 = pneg %p64
      %p71 = scmp.eq.s32.totalorder %s13, 2
      %p72 = por %p70, %p71
      %p73 = scmp.ne.s32.totalorder %s65, %s68
      %p74 = scmp.eq.s32.totalorder %s13, 0
      %p75 = por %p73, %p74
      %p76 = scmp.ne.s32.totalorder %s65, %s68
      %p77 = scmp.eq.s32.totalorder %s18, 2
      %p78 = por %p76, %p77
      %p79 = scmp.ne.s32.totalorder %s68, %s69
      %p80 = scmp.eq.s32.totalorder %s18, 0
      %p81 = por %p79, %p80
      %p82 = scmp.ne.s32.totalorder %s68, %s69
      %p83 = scmp.eq.s32.totalorder %s19, 2
      %p84 = por %p82, %p83
      %p86 = scmp.ne.s32.totalorder %s69, %s85
      %p87 = scmp.eq.s32.totalorder %s19, 0
      %p88 = por %p86, %p87
      %s89 = ssub.s32 %s13, %s20
      %p90 = scmp.eq.s32.totalorder %s89, 0
      %s92 = sadd.s32 %s91, 1
      %s93 = scalar_select %p90, %s91, %s92
      %p96 = pneg %p90
      %p97 = scmp.eq.s32.totalorder %s13, 2
      %p98 = por %p96, %p97
      %p99 = scmp.ne.s32.totalorder %s91, %s94
      %p100 = scmp.eq.s32.totalorder %s13, 0
      %p101 = por %p99, %p100
      %p102 = scmp.ne.s32.totalorder %s91, %s94
      %p103 = scmp.eq.s32.totalorder %s18, 2
      %p104 = por %p102, %p103
      %p105 = scmp.ne.s32.totalorder %s94, %s95
      %p106 = scmp.eq.s32.totalorder %s18, 0
      %p107 = por %p105, %p106
      %p108 = scmp.ne.s32.totalorder %s94, %s95
      %p109 = scmp.eq.s32.totalorder %s19, 2
      %p110 = por %p108, %p109
      %p112 = scmp.ne.s32.totalorder %s95, %s111
      %p113 = scmp.eq.s32.totalorder %s19, 0
      %p114 = por %p112, %p113
      %s116 = sadd.s32 %s115, 1
      %p119 = scmp.eq.s32.totalorder %s13, 2
      %p120 = scmp.ne.s32.totalorder %s115, %s117
      %p121 = scmp.eq.s32.totalorder %s13, 0
      %p122 = por %p120, %p121
      %p123 = scmp.ne.s32.totalorder %s115, %s117
      %p124 = scmp.eq.s32.totalorder %s18, 2
      %p125 = por %p123, %p124
      %p126 = scmp.ne.s32.totalorder %s117, %s118
      %p127 = scmp.eq.s32.totalorder %s18, 0
      %p128 = por %p126, %p127
      %p129 = scmp.ne.s32.totalorder %s117, %s118
      %p130 = scmp.eq.s32.totalorder %s19, 2
      %p131 = por %p129, %p130
      %p133 = scmp.ne.s32.totalorder %s118, %s132
      %p134 = scmp.eq.s32.totalorder %s19, 0
      %p135 = por %p133, %p134
      %p136 = scmp.le.s32.totalorder 1, %s13
      %p137 = scmp.lt.s32.totalorder %s13, 4
      %p138 = pnand %p136, %p137
      %p139 = pneg %p138
      // Predicated region
      $region9: #{tpu_custom_call.1} parent=5 // pred_check
        _
      $region10: #{tpu_custom_call.1} parent=5 // pred_check_branch
        %141 = sbr.rel (%p138) target = $region12
      $region11: #{tpu_custom_call.1} parent=5 // pred_region
        %s142 = ssub.s32 %s13, 1
        // Predicated region
        $region13: #{tpu_custom_call.1} parent=11 // pred_check
          %p143 = pneg %p34
        $region14: #{tpu_custom_call.1} parent=11 // pred_check_branch
          %145 = sbr.rel (%p143) target = $region16
        $region15: #{tpu_custom_call.1} parent=11 // pred_region
          %s147 = ssub.s32 1024, 1024
          %148 = vsyncadd [#allocation4], %s147
          %s149 = sshll.u32 [#allocation3], 4
          %s150 = int_to_ptr.vmem [resolvable:$true] %s149
          %155 = dma.hbm_to_vmem [thread:$0]  %s0, 1024, %s150, [#allocation4], 64, 64, 4
        $region16: #{tpu_custom_call.1} parent=11 // pred_fallthru
          _
        // Predicated region
        $region17: #{tpu_custom_call.1} parent=11 // pred_check
          %p156 = pneg %p55
        $region18: #{tpu_custom_call.1} parent=11 // pred_check_branch
          %158 = sbr.rel (%p156) target = $region20
        $region19: #{tpu_custom_call.1} parent=11 // pred_region
          %s160 = ssub.s32 1024, 1024
          %161 = vsyncadd [#allocation7], %s160
          %s162 = sshll.u32 [#allocation6], 4
          %s163 = int_to_ptr.vmem [resolvable:$true] %s162
          %168 = dma.hbm_to_vmem [thread:$0]  %s1, 1024, %s163, [#allocation7], 64, 64, 4
        $region20: #{tpu_custom_call.1} parent=11 // pred_fallthru
          _
      $region12: #{tpu_custom_call.1} parent=5 // pred_fallthru
        _
      %p169 = scmp.lt.s32.totalorder %s13, 3
      // Predicated region
      $region21: #{tpu_custom_call.1} parent=5 // pred_check
        %p170 = pneg %p169
      $region22: #{tpu_custom_call.1} parent=5 // pred_check_branch
        %172 = sbr.rel (%p170) target = $region24
      $region23: #{tpu_custom_call.1} parent=5 // pred_region
        // Predicated region
        $region25: #{tpu_custom_call.1} parent=23 // pred_check
          %p173 = pneg %p75
        $region26: #{tpu_custom_call.1} parent=23 // pred_check_branch
          %175 = sbr.rel (%p173) target = $region28
        $region27: #{tpu_custom_call.1} parent=23 // pred_region
          %s176 = sand.u32 %s13, 1
          %s177 = scalar_lea.sflag [#allocation4], %s176
          %s178 = sand.u32 %s65, 1
          %s179 = smul.addr %s178, 128
          %s180 = scalar_lea.vmem [#allocation8], %s179
          %s182 = ssub.s32 2048, 2048
          %183 = vsyncadd %s177, %s182
          %s184 = smul.addr %s13, 32
          %s185 = smul.addr %s184, 64
          %s186 = scalar_lea.hbm %s2, %s185
          %s187 = sshll.u32 %s180, 4
          %s188 = int_to_ptr.vmem [resolvable:$true] %s187
          %193 = dma.hbm_to_vmem [thread:$0]  %s186, 2048, %s188, %s177, 64, 64, 4
        $region28: #{tpu_custom_call.1} parent=23 // pred_fallthru
          _
        // Predicated region
        $region29: #{tpu_custom_call.1} parent=23 // pred_check
          %p194 = pneg %p101
        $region30: #{tpu_custom_call.1} parent=23 // pred_check_branch
          %196 = sbr.rel (%p194) target = $region32
        $region31: #{tpu_custom_call.1} parent=23 // pred_region
          %p197 = scmp.lt.s32.totalorder %s13, 2
          %s198 = scalar_select %p197, %s13, 2
          %s199 = scalar_lea.vmem %s3, %s198
        $region32: #{tpu_custom_call.1} parent=23 // pred_fallthru
          _
      $region24: #{tpu_custom_call.1} parent=5 // pred_fallthru
        _
      %p200 = scmp.le.s32.totalorder 1, %s13
      %p201 = scmp.lt.s32.totalorder %s13, 4
      %p202 = pnand %p200, %p201
      %p203 = pneg %p202
      // Predicated region
      $region33: #{tpu_custom_call.1} parent=5 // pred_check
        _
      $region34: #{tpu_custom_call.1} parent=5 // pred_check_branch
        %205 = sbr.rel (%p202) target = $region36
      $region35: #{tpu_custom_call.1} parent=5 // pred_region
        %s206 = ssub.s32 %s13, 1
        // Predicated region
        $region37: #{tpu_custom_call.1} parent=35 // pred_check
          %p207 = pneg %p34
        $region38: #{tpu_custom_call.1} parent=35 // pred_check_branch
          %209 = sbr.rel (%p207) target = $region40
        $region39: #{tpu_custom_call.1} parent=35 // pred_region
          %210 = dma.done [#allocation4], 1024
        $region40: #{tpu_custom_call.1} parent=35 // pred_fallthru
          _
        // Predicated region
        $region41: #{tpu_custom_call.1} parent=35 // pred_check
          %p211 = pneg %p55
        $region42: #{tpu_custom_call.1} parent=35 // pred_check_branch
          %213 = sbr.rel (%p211) target = $region44
        $region43: #{tpu_custom_call.1} parent=35 // pred_region
          %214 = dma.done [#allocation7], 1024
        $region44: #{tpu_custom_call.1} parent=35 // pred_fallthru
          _
        %s215 = sand.u32 %s18, 1
        %s216 = scalar_lea.sflag [#allocation4], %s215
        %s217 = sand.u32 %s68, 1
        %s218 = smul.addr %s217, 128
        %s219 = scalar_lea.vmem [#allocation8], %s218
        // Predicated region
        $region45: #{tpu_custom_call.1} parent=35 // pred_check
          %p220 = pneg %p81
        $region46: #{tpu_custom_call.1} parent=35 // pred_check_branch
          %222 = sbr.rel (%p220) target = $region48
        $region47: #{tpu_custom_call.1} parent=35 // pred_region
          %223 = dma.done %s216, 2048
        $region48: #{tpu_custom_call.1} parent=35 // pred_fallthru
          _
        %p224 = pneg %p34
        %p225 = pneg %p31
        %p226 = pneg %p55
        %p227 = pneg %p52
        %s228 = sand.u32 %s18, 1
        %s229 = scalar_lea.sflag [#allocation4], %s228
        %s230 = sand.u32 %s68, 1
        %s231 = smul.addr %s230, 128
        %s232 = scalar_lea.vmem [#allocation8], %s231
        %p233 = pneg %p81
        %p234 = pneg %p78
        %p235 = scmp.lt.s32.totalorder %s18, 2
        %s236 = scalar_select %p235, %s18, 2
        %s237 = scalar_lea.vmem %s3, %s236
        %p238 = pneg %p107
        %p239 = pneg %p104
        %p240 = pneg %p128
        %p241 = pneg %p125
        %p242 = scmp.lt.s32.totalorder %s18, 2
        %s243 = scalar_select %p242, %s18, 2
        %s244 = scalar_lea.vmem %s3, %s243
        %p246 = scmp.eq.s32.totalorder %s18, 0
        // Predicated region
        $region49: #{tpu_custom_call.1} parent=35 // pred_check
          %p247 = pneg %p246
        $region50: #{tpu_custom_call.1} parent=35 // pred_check_branch
          %249 = sbr.rel (%p247) target = $region52
        $region51: #{tpu_custom_call.1} parent=35 // pred_region
          %v250 = vld [vmem:[#allocation6] sm:$0xf]
          %v251 = vld [vmem:[#allocation6 + $0x4] sm:$0xf]
          %v252 = vld [vmem:[#allocation6 + $0x8] sm:$0xf]
          %v253 = vld [vmem:[#allocation6 + $0xc] sm:$0xf]
          %v254 = vld [vmem:[#allocation6 + $0x10] sm:$0xf]
          %v255 = vld [vmem:[#allocation6 + $0x14] sm:$0xf]
          %v256 = vld [vmem:[#allocation6 + $0x18] sm:$0xf]
          %v257 = vld [vmem:[#allocation6 + $0x1c] sm:$0xf]
          %v258 = vld [vmem:[#allocation6 + $0x20] sm:$0xf]
          %v259 = vld [vmem:[#allocation6 + $0x24] sm:$0xf]
          %v260 = vld [vmem:[#allocation6 + $0x28] sm:$0xf]
          %v261 = vld [vmem:[#allocation6 + $0x2c] sm:$0xf]
          %v262 = vld [vmem:[#allocation6 + $0x30] sm:$0xf]
          %v263 = vld [vmem:[#allocation6 + $0x34] sm:$0xf]
          %v264 = vld [vmem:[#allocation6 + $0x38] sm:$0xf]
          %v265 = vld [vmem:[#allocation6 + $0x3c] sm:$0xf]
          %v282 = vunpack.c.l.b16 %v250
          %v283 = vunpack.c.l.b16 %v251
          %v284 = vunpack.c.l.b16 %v252
          %v285 = vunpack.c.l.b16 %v253
          %v286 = vunpack.c.l.b16 %v254
          %v287 = vunpack.c.l.b16 %v255
          %v288 = vunpack.c.l.b16 %v256
          %v289 = vunpack.c.l.b16 %v257
          %v290 = vunpack.c.l.b16 %v258
          %v291 = vunpack.c.l.b16 %v259
          %v292 = vunpack.c.l.b16 %v260
          %v293 = vunpack.c.l.b16 %v261
          %v294 = vunpack.c.l.b16 %v262
          %v295 = vunpack.c.l.b16 %v263
          %v296 = vunpack.c.l.b16 %v264
          %v297 = vunpack.c.l.b16 %v265
          %v298 = vpack.c.b16 %v283, %v282
          %v299 = vpack.c.b16 %v285, %v284
          %v300 = vpack.c.b16 %v287, %v286
          %v301 = vpack.c.b16 %v289, %v288
          %v302 = vpack.c.b16 %v291, %v290
          %v303 = vpack.c.b16 %v293, %v292
          %v304 = vpack.c.b16 %v295, %v294
          %v305 = vpack.c.b16 %v297, %v296
          %314 = vst [vmem:[#allocation2] sm:$0xff] %v298
          %315 = vst [vmem:[#allocation2 + $0x8] sm:$0xff] %v299
          %316 = vst [vmem:[#allocation2 + $0x10] sm:$0xff] %v300
          %317 = vst [vmem:[#allocation2 + $0x18] sm:$0xff] %v301
          %318 = vst [vmem:[#allocation2 + $0x20] sm:$0xff] %v302
          %319 = vst [vmem:[#allocation2 + $0x28] sm:$0xff] %v303
          %320 = vst [vmem:[#allocation2 + $0x30] sm:$0xff] %v304
          %321 = vst [vmem:[#allocation2 + $0x38] sm:$0xff] %v305
        $region52: #{tpu_custom_call.1} parent=35 // pred_fallthru
          _
        %v322 = vld [vmem:[#allocation2] sm:$0xff]
        %v323 = vld [vmem:[#allocation2 + $0x8] sm:$0xff]
        %v324 = vld [vmem:[#allocation2 + $0x10] sm:$0xff]
        %v325 = vld [vmem:[#allocation2 + $0x18] sm:$0xff]
        %v326 = vld [vmem:[#allocation2 + $0x20] sm:$0xff]
        %v327 = vld [vmem:[#allocation2 + $0x28] sm:$0xff]
        %v328 = vld [vmem:[#allocation2 + $0x30] sm:$0xff]
        %v329 = vld [vmem:[#allocation2 + $0x38] sm:$0xff]
        %v330 = vld [vmem:[#allocation3] sm:$0xf]
        %v331 = vld [vmem:[#allocation3 + $0x4] sm:$0xf]
        %v332 = vld [vmem:[#allocation3 + $0x8] sm:$0xf]
        %v333 = vld [vmem:[#allocation3 + $0xc] sm:$0xf]
        %v334 = vld [vmem:[#allocation3 + $0x10] sm:$0xf]
        %v335 = vld [vmem:[#allocation3 + $0x14] sm:$0xf]
        %v336 = vld [vmem:[#allocation3 + $0x18] sm:$0xf]
        %v337 = vld [vmem:[#allocation3 + $0x1c] sm:$0xf]
        %v338 = vld [vmem:[#allocation3 + $0x20] sm:$0xf]
        %v339 = vld [vmem:[#allocation3 + $0x24] sm:$0xf]
        %v340 = vld [vmem:[#allocation3 + $0x28] sm:$0xf]
        %v341 = vld [vmem:[#allocation3 + $0x2c] sm:$0xf]
        %v342 = vld [vmem:[#allocation3 + $0x30] sm:$0xf]
        %v343 = vld [vmem:[#allocation3 + $0x34] sm:$0xf]
        %v344 = vld [vmem:[#allocation3 + $0x38] sm:$0xf]
        %v345 = vld [vmem:[#allocation3 + $0x3c] sm:$0xf]
        %v362 = vunpack.c.l.b16 %v330
        %v363 = vunpack.c.l.b16 %v331
        %v364 = vunpack.c.l.b16 %v332
        %v365 = vunpack.c.l.b16 %v333
        %v366 = vunpack.c.l.b16 %v334
        %v367 = vunpack.c.l.b16 %v335
        %v368 = vunpack.c.l.b16 %v336
        %v369 = vunpack.c.l.b16 %v337
        %v370 = vunpack.c.l.b16 %v338
        %v371 = vunpack.c.l.b16 %v339
        %v372 = vunpack.c.l.b16 %v340
        %v373 = vunpack.c.l.b16 %v341
        %v374 = vunpack.c.l.b16 %v342
        %v375 = vunpack.c.l.b16 %v343
        %v376 = vunpack.c.l.b16 %v344
        %v377 = vunpack.c.l.b16 %v345
        %v378 = vpack.c.b16 %v363, %v362
        %v379 = vpack.c.b16 %v365, %v364
        %v380 = vpack.c.b16 %v367, %v366
        %v381 = vpack.c.b16 %v369, %v368
        %v382 = vpack.c.b16 %v371, %v370
        %v383 = vpack.c.b16 %v373, %v372
        %v384 = vpack.c.b16 %v375, %v374
        %v385 = vpack.c.b16 %v377, %v376
        %394 = vmatprep.subr.bf16.mxu0 0
        %395 = vmatpush1.bf16.msra.mxu0 %v322
        %396 = vmatprep.subr.bf16.mxu0 0
        %397 = vmatpush1.bf16.msra.mxu0 %v323
        %398 = vmatprep.subr.bf16.mxu0 0
        %399 = vmatpush1.bf16.msra.mxu0 %v324
        %400 = vmatprep.subr.bf16.mxu0 0
        %401 = vmatpush1.bf16.msra.mxu0 %v325
        %402 = vmatprep.subr.bf16.mxu0 0
        %403 = vmatpush1.bf16.msra.mxu0 %v326
        %404 = vmatprep.subr.bf16.mxu0 0
        %405 = vmatpush1.bf16.msra.mxu0 %v327
        %406 = vmatprep.subr.bf16.mxu0 0
        %407 = vmatpush1.bf16.msra.mxu0 %v328
        %408 = vmatprep.subr.bf16.mxu0 0
        %409 = vmatpush1.bf16.msra.mxu0 %v329
        %410 = vmatprep.subr.bf16.mxu0 0
        %411 = vmatpush1.bf16.msra.mxu0 0
        %412 = vmatprep.subr.bf16.mxu0 0
        %413 = vmatpush1.bf16.msra.mxu0 0
        %414 = vmatprep.subr.bf16.mxu0 0
        %415 = vmatpush1.bf16.msra.mxu0 0
        %416 = vmatprep.subr.bf16.mxu0 0
        %417 = vmatpush1.bf16.msra.mxu0 0
        %418 = vmatprep.subr.bf16.mxu0 0
        %419 = vmatpush1.bf16.msra.mxu0 0
        %420 = vmatprep.subr.bf16.mxu0 0
        %421 = vmatpush1.bf16.msra.mxu0 0
        %422 = vmatprep.subr.bf16.mxu0 0
        %423 = vmatpush1.bf16.msra.mxu0 0
        %424 = vmatprep.subr.bf16.mxu0 0
        %425 = vmatpush1.bf16.msra.mxu0 0
        %426 = vmatprep.mubr.bf16.mxu0 0
        %427 = vmatmul.mubr.bf16.gmra.mrb[0].mxu0 %v378
        %v428 = vpop.f32.mrb[0].mxu0
        %v429 = vadd.f32 0.0, %v428
        %v430 = vpop.f32.mrb[0].mxu0
        %v431 = vpop.f32.mrb[0].mxu0
        %v432 = vadd.f32 0.0, %v431
        %v433 = vpop.f32.mrb[0].mxu0
        %434 = vmatprep.mubr.bf16.mxu0 0
        %435 = vmatmul.mubr.bf16.gmra.mrb[0].mxu0 %v379
        %v436 = vpop.f32.mrb[0].mxu0
        %v437 = vadd.f32 0.0, %v436
        %v438 = vpop.f32.mrb[0].mxu0
        %v439 = vpop.f32.mrb[0].mxu0
        %v440 = vadd.f32 0.0, %v439
        %v441 = vpop.f32.mrb[0].mxu0
        %442 = vmatprep.mubr.bf16.mxu0 0
        %443 = vmatmul.mubr.bf16.gmra.mrb[0].mxu0 %v380
        %v444 = vpop.f32.mrb[0].mxu0
        %v445 = vadd.f32 0.0, %v444
        %v446 = vpop.f32.mrb[0].mxu0
        %v447 = vpop.f32.mrb[0].mxu0
        %v448 = vadd.f32 0.0, %v447
        %v449 = vpop.f32.mrb[0].mxu0
        %450 = vmatprep.mubr.bf16.mxu0 0
        %451 = vmatmul.mubr.bf16.gmra.mrb[0].mxu0 %v381
        %v452 = vpop.f32.mrb[0].mxu0
        %v453 = vadd.f32 0.0, %v452
        %v454 = vpop.f32.mrb[0].mxu0
        %v455 = vpop.f32.mrb[0].mxu0
        %v456 = vadd.f32 0.0, %v455
        %v457 = vpop.f32.mrb[0].mxu0
        %458 = vmatprep.mubr.bf16.mxu0 0
        %459 = vmatmul.mubr.bf16.gmra.mrb[0].mxu0 %v382
        %v460 = vpop.f32.mrb[0].mxu0
        %v461 = vadd.f32 0.0, %v460
        %v462 = vpop.f32.mrb[0].mxu0
        %v463 = vpop.f32.mrb[0].mxu0
        %v464 = vadd.f32 0.0, %v463
        %v465 = vpop.f32.mrb[0].mxu0
        %466 = vmatprep.mubr.bf16.mxu0 0
        %467 = vmatmul.mubr.bf16.gmra.mrb[0].mxu0 %v383
        %v468 = vpop.f32.mrb[0].mxu0
        %v469 = vadd.f32 0.0, %v468
        %v470 = vpop.f32.mrb[0].mxu0
        %v471 = vpop.f32.mrb[0].mxu0
        %v472 = vadd.f32 0.0, %v471
        %v473 = vpop.f32.mrb[0].mxu0
        %474 = vmatprep.mubr.bf16.mxu0 0
        %475 = vmatmul.mubr.bf16.gmra.mrb[0].mxu0 %v384
        %v476 = vpop.f32.mrb[0].mxu0
        %v477 = vadd.f32 0.0, %v476
        %v478 = vpop.f32.mrb[0].mxu0
        %v479 = vpop.f32.mrb[0].mxu0
        %v480 = vadd.f32 0.0, %v479
        %v481 = vpop.f32.mrb[0].mxu0
        %482 = vmatprep.mubr.bf16.mxu0 0
        %483 = vmatmul.mubr.bf16.gmra.mrb[0].mxu0 %v385
        %v484 = vpop.f32.mrb[0].mxu0
        %v485 = vadd.f32 0.0, %v484
        %v486 = vpop.f32.mrb[0].mxu0
        %v487 = vpop.f32.mrb[0].mxu0
        %v488 = vadd.f32 0.0, %v487
        %v489 = vpop.f32.mrb[0].mxu0
        %490 = vdwg.mxu0
        %v491 = vpack.c.bf16 %v432, %v429
        %v492 = vpack.c.bf16 %v440, %v437
        %v493 = vpack.c.bf16 %v448, %v445
        %v494 = vpack.c.bf16 %v456, %v453
        %v495 = vpack.c.bf16 %v464, %v461
        %v496 = vpack.c.bf16 %v472, %v469
        %v497 = vpack.c.bf16 %v480, %v477
        %v498 = vpack.c.bf16 %v488, %v485
        %v499 = vld [vmem:[%s219] sm:$0xf]
        %v500 = vld [vmem:[%s219 + $0x4] sm:$0xf]
        %v501 = vld [vmem:[%s219 + $0x8] sm:$0xf]
        %v502 = vld [vmem:[%s219 + $0xc] sm:$0xf]
        %v503 = vld [vmem:[%s219 + $0x10] sm:$0xf]
        %v504 = vld [vmem:[%s219 + $0x14] sm:$0xf]
        %v505 = vld [vmem:[%s219 + $0x18] sm:$0xf]
        %v506 = vld [vmem:[%s219 + $0x1c] sm:$0xf]
        %v507 = vld [vmem:[%s219 + $0x20] sm:$0xf]
        %v508 = vld [vmem:[%s219 + $0x24] sm:$0xf]
        %v509 = vld [vmem:[%s219 + $0x28] sm:$0xf]
        %v510 = vld [vmem:[%s219 + $0x2c] sm:$0xf]
        %v511 = vld [vmem:[%s219 + $0x30] sm:$0xf]
        %v512 = vld [vmem:[%s219 + $0x34] sm:$0xf]
        %v513 = vld [vmem:[%s219 + $0x38] sm:$0xf]
        %v514 = vld [vmem:[%s219 + $0x3c] sm:$0xf]
        %v515 = vld [vmem:[%s219 + $0x40] sm:$0xf]
        %v516 = vld [vmem:[%s219 + $0x44] sm:$0xf]
        %v517 = vld [vmem:[%s219 + $0x48] sm:$0xf]
        %v518 = vld [vmem:[%s219 + $0x4c] sm:$0xf]
        %v519 = vld [vmem:[%s219 + $0x50] sm:$0xf]
        %v520 = vld [vmem:[%s219 + $0x54] sm:$0xf]
        %v521 = vld [vmem:[%s219 + $0x58] sm:$0xf]
        %v522 = vld [vmem:[%s219 + $0x5c] sm:$0xf]
        %v523 = vld [vmem:[%s219 + $0x60] sm:$0xf]
        %v524 = vld [vmem:[%s219 + $0x64] sm:$0xf]
        %v525 = vld [vmem:[%s219 + $0x68] sm:$0xf]
        %v526 = vld [vmem:[%s219 + $0x6c] sm:$0xf]
        %v527 = vld [vmem:[%s219 + $0x70] sm:$0xf]
        %v528 = vld [vmem:[%s219 + $0x74] sm:$0xf]
        %v529 = vld [vmem:[%s219 + $0x78] sm:$0xf]
        %v530 = vld [vmem:[%s219 + $0x7c] sm:$0xf]
        %v547 = vunpack.c.l.b16 %v515
        %v548 = vunpack.c.l.b16 %v516
        %v549 = vunpack.c.l.b16 %v517
        %v550 = vunpack.c.l.b16 %v518
        %v551 = vunpack.c.l.b16 %v519
        %v552 = vunpack.c.l.b16 %v520
        %v553 = vunpack.c.l.b16 %v521
        %v554 = vunpack.c.l.b16 %v522
        %v555 = vunpack.c.l.b16 %v523
        %v556 = vunpack.c.l.b16 %v524
        %v557 = vunpack.c.l.b16 %v525
        %v558 = vunpack.c.l.b16 %v526
        %v559 = vunpack.c.l.b16 %v527
        %v560 = vunpack.c.l.b16 %v528
        %v561 = vunpack.c.l.b16 %v529
        %v562 = vunpack.c.l.b16 %v530
        %v563 = vpack.c.b16 %v548, %v547
        %v564 = vpack.c.b16 %v550, %v549
        %v565 = vpack.c.b16 %v552, %v551
        %v566 = vpack.c.b16 %v554, %v553
        %v567 = vpack.c.b16 %v556, %v555
        %v568 = vpack.c.b16 %v558, %v557
        %v569 = vpack.c.b16 %v560, %v559
        %v570 = vpack.c.b16 %v562, %v561
        %579 = vmatprep.subr.bf16.mxu0 0
        %580 = vmatpush1.bf16.msra.mxu0 %v563
        %581 = vmatprep.subr.bf16.mxu0 0
        %582 = vmatpush1.bf16.msra.mxu0 %v564
        %583 = vmatprep.subr.bf16.mxu0 0
        %584 = vmatpush1.bf16.msra.mxu0 %v565
        %585 = vmatprep.subr.bf16.mxu0 0
        %586 = vmatpush1.bf16.msra.mxu0 %v566
        %587 = vmatprep.subr.bf16.mxu0 0
        %588 = vmatpush1.bf16.msra.mxu0 %v567
        %589 = vmatprep.subr.bf16.mxu0 0
        %590 = vmatpush1.bf16.msra.mxu0 %v568
        %591 = vmatprep.subr.bf16.mxu0 0
        %592 = vmatpush1.bf16.msra.mxu0 %v569
        %593 = vmatprep.subr.bf16.mxu0 0
        %594 = vmatpush1.bf16.msra.mxu0 %v570
        %595 = vmatprep.subr.bf16.mxu0 0
        %596 = vmatpush1.bf16.msra.mxu0 0
        %597 = vmatprep.subr.bf16.mxu0 0
        %598 = vmatpush1.bf16.msra.mxu0 0
        %599 = vmatprep.subr.bf16.mxu0 0
        %600 = vmatpush1.bf16.msra.mxu0 0
        %601 = vmatprep.subr.bf16.mxu0 0
        %602 = vmatpush1.bf16.msra.mxu0 0
        %603 = vmatprep.subr.bf16.mxu0 0
        %604 = vmatpush1.bf16.msra.mxu0 0
        %605 = vmatprep.subr.bf16.mxu0 0
        %606 = vmatpush1.bf16.msra.mxu0 0
        %607 = vmatprep.subr.bf16.mxu0 0
        %608 = vmatpush1.bf16.msra.mxu0 0
        %609 = vmatprep.subr.bf16.mxu0 0
        %610 = vmatpush1.bf16.msra.mxu0 0
        %611 = vmatprep.mubr.bf16.mxu0 0
        %612 = vmatmul.mubr.bf16.gmra.mrb[0].mxu0 %v322
        %v613 = vpop.f32.mrb[0].mxu0
        %v614 = vadd.f32 0.0, %v613
        %v615 = vpop.f32.mrb[0].mxu0
        %v616 = vpop.f32.mrb[0].mxu0
        %v617 = vadd.f32 0.0, %v616
        %v618 = vpop.f32.mrb[0].mxu0
        %619 = vmatprep.mubr.bf16.mxu0 0
        %620 = vmatmul.mubr.bf16.gmra.mrb[0].mxu0 %v323
        %v621 = vpop.f32.mrb[0].mxu0
        %v622 = vadd.f32 0.0, %v621
        %v623 = vpop.f32.mrb[0].mxu0
        %v624 = vpop.f32.mrb[0].mxu0
        %v625 = vadd.f32 0.0, %v624
        %v626 = vpop.f32.mrb[0].mxu0
        %627 = vmatprep.mubr.bf16.mxu0 0
        %628 = vmatmul.mubr.bf16.gmra.mrb[0].mxu0 %v324
        %v629 = vpop.f32.mrb[0].mxu0
        %v630 = vadd.f32 0.0, %v629
        %v631 = vpop.f32.mrb[0].mxu0
        %v632 = vpop.f32.mrb[0].mxu0
        %v633 = vadd.f32 0.0, %v632
        %v634 = vpop.f32.mrb[0].mxu0
        %635 = vmatprep.mubr.bf16.mxu0 0
        %636 = vmatmul.mubr.bf16.gmra.mrb[0].mxu0 %v325
        %v637 = vpop.f32.mrb[0].mxu0
        %v638 = vadd.f32 0.0, %v637
        %v639 = vpop.f32.mrb[0].mxu0
        %v640 = vpop.f32.mrb[0].mxu0
        %v641 = vadd.f32 0.0, %v640
        %v642 = vpop.f32.mrb[0].mxu0
        %643 = vmatprep.mubr.bf16.mxu0 0
        %644 = vmatmul.mubr.bf16.gmra.mrb[0].mxu0 %v326
        %v645 = vpop.f32.mrb[0].mxu0
        %v646 = vadd.f32 0.0, %v645
        %v647 = vpop.f32.mrb[0].mxu0
        %v648 = vpop.f32.mrb[0].mxu0
        %v649 = vadd.f32 0.0, %v648
        %v650 = vpop.f32.mrb[0].mxu0
        %651 = vmatprep.mubr.bf16.mxu0 0
        %652 = vmatmul.mubr.bf16.gmra.mrb[0].mxu0 %v327
        %v653 = vpop.f32.mrb[0].mxu0
        %v654 = vadd.f32 0.0, %v653
        %v655 = vpop.f32.mrb[0].mxu0
        %v656 = vpop.f32.mrb[0].mxu0
        %v657 = vadd.f32 0.0, %v656
        %v658 = vpop.f32.mrb[0].mxu0
        %659 = vmatprep.mubr.bf16.mxu0 0
        %660 = vmatmul.mubr.bf16.gmra.mrb[0].mxu0 %v328
        %v661 = vpop.f32.mrb[0].mxu0
        %v662 = vadd.f32 0.0, %v661
        %v663 = vpop.f32.mrb[0].mxu0
        %v664 = vpop.f32.mrb[0].mxu0
        %v665 = vadd.f32 0.0, %v664
        %v666 = vpop.f32.mrb[0].mxu0
        %667 = vmatprep.mubr.bf16.mxu0 0
        %668 = vmatmul.mubr.bf16.gmra.mrb[0].mxu0 %v329
        %v669 = vpop.f32.mrb[0].mxu0
        %v670 = vadd.f32 0.0, %v669
        %v671 = vpop.f32.mrb[0].mxu0
        %v672 = vpop.f32.mrb[0].mxu0
        %v673 = vadd.f32 0.0, %v672
        %v674 = vpop.f32.mrb[0].mxu0
        %675 = vdwg.mxu0
        %v692 = vunpack.c.l.b16 %v499
        %v693 = vunpack.c.l.b16 %v500
        %v694 = vunpack.c.l.b16 %v501
        %v695 = vunpack.c.l.b16 %v502
        %v696 = vunpack.c.l.b16 %v503
        %v697 = vunpack.c.l.b16 %v504
        %v698 = vunpack.c.l.b16 %v505
        %v699 = vunpack.c.l.b16 %v506
        %v700 = vunpack.c.l.b16 %v507
        %v701 = vunpack.c.l.b16 %v508
        %v702 = vunpack.c.l.b16 %v509
        %v703 = vunpack.c.l.b16 %v510
        %v704 = vunpack.c.l.b16 %v511
        %v705 = vunpack.c.l.b16 %v512
        %v706 = vunpack.c.l.b16 %v513
        %v707 = vunpack.c.l.b16 %v514
        %v708 = vpack.c.b16 %v693, %v692
        %v709 = vpack.c.b16 %v695, %v694
        %v710 = vpack.c.b16 %v697, %v696
        %v711 = vpack.c.b16 %v699, %v698
        %v712 = vpack.c.b16 %v701, %v700
        %v713 = vpack.c.b16 %v703, %v702
        %v714 = vpack.c.b16 %v705, %v704
        %v715 = vpack.c.b16 %v707, %v706
        %724 = vmatprep.subr.bf16.mxu0 0
        %725 = vmatpush1.bf16.msra.mxu0 %v708
        %726 = vmatprep.subr.bf16.mxu0 0
        %727 = vmatpush1.bf16.msra.mxu0 %v709
        %728 = vmatprep.subr.bf16.mxu0 0
        %729 = vmatpush1.bf16.msra.mxu0 %v710
        %730 = vmatprep.subr.bf16.mxu0 0
        %731 = vmatpush1.bf16.msra.mxu0 %v711
        %732 = vmatprep.subr.bf16.mxu0 0
        %733 = vmatpush1.bf16.msra.mxu0 %v712
        %734 = vmatprep.subr.bf16.mxu0 0
        %735 = vmatpush1.bf16.msra.mxu0 %v713
        %736 = vmatprep.subr.bf16.mxu0 0
        %737 = vmatpush1.bf16.msra.mxu0 %v714
        %738 = vmatprep.subr.bf16.mxu0 0
        %739 = vmatpush1.bf16.msra.mxu0 %v715
        %740 = vmatprep.subr.bf16.mxu0 0
        %741 = vmatpush1.bf16.msra.mxu0 0
        %742 = vmatprep.subr.bf16.mxu0 0
        %743 = vmatpush1.bf16.msra.mxu0 0
        %744 = vmatprep.subr.bf16.mxu0 0
        %745 = vmatpush1.bf16.msra.mxu0 0
        %746 = vmatprep.subr.bf16.mxu0 0
        %747 = vmatpush1.bf16.msra.mxu0 0
        %748 = vmatprep.subr.bf16.mxu0 0
        %749 = vmatpush1.bf16.msra.mxu0 0
        %750 = vmatprep.subr.bf16.mxu0 0
        %751 = vmatpush1.bf16.msra.mxu0 0
        %752 = vmatprep.subr.bf16.mxu0 0
        %753 = vmatpush1.bf16.msra.mxu0 0
        %754 = vmatprep.subr.bf16.mxu0 0
        %755 = vmatpush1.bf16.msra.mxu0 0
        %756 = vmatprep.mubr.bf16.mxu0 0
        %757 = vmatmul.mubr.bf16.gmra.mrb[0].mxu0 %v491
        %v758 = vpop.f32.mrb[0].mxu0
        %v759 = vadd.f32 %v614, %v758
        %v760 = vpop.f32.mrb[0].mxu0
        %v761 = vpop.f32.mrb[0].mxu0
        %v762 = vadd.f32 %v617, %v761
        %v763 = vpop.f32.mrb[0].mxu0
        %764 = vmatprep.mubr.bf16.mxu0 0
        %765 = vmatmul.mubr.bf16.gmra.mrb[0].mxu0 %v492
        %v766 = vpop.f32.mrb[0].mxu0
        %v767 = vadd.f32 %v622, %v766
        %v768 = vpop.f32.mrb[0].mxu0
        %v769 = vpop.f32.mrb[0].mxu0
        %v770 = vadd.f32 %v625, %v769
        %v771 = vpop.f32.mrb[0].mxu0
        %772 = vmatprep.mubr.bf16.mxu0 0
        %773 = vmatmul.mubr.bf16.gmra.mrb[0].mxu0 %v493
        %v774 = vpop.f32.mrb[0].mxu0
        %v775 = vadd.f32 %v630, %v774
        %v776 = vpop.f32.mrb[0].mxu0
        %v777 = vpop.f32.mrb[0].mxu0
        %v778 = vadd.f32 %v633, %v777
        %v779 = vpop.f32.mrb[0].mxu0
        %780 = vmatprep.mubr.bf16.mxu0 0
        %781 = vmatmul.mubr.bf16.gmra.mrb[0].mxu0 %v494
        %v782 = vpop.f32.mrb[0].mxu0
        %v783 = vadd.f32 %v638, %v782
        %v784 = vpop.f32.mrb[0].mxu0
        %v785 = vpop.f32.mrb[0].mxu0
        %v786 = vadd.f32 %v641, %v785
        %v787 = vpop.f32.mrb[0].mxu0
        %788 = vmatprep.mubr.bf16.mxu0 0
        %789 = vmatmul.mubr.bf16.gmra.mrb[0].mxu0 %v495
        %v790 = vpop.f32.mrb[0].mxu0
        %v791 = vadd.f32 %v646, %v790
        %v792 = vpop.f32.mrb[0].mxu0
        %v793 = vpop.f32.mrb[0].mxu0
        %v794 = vadd.f32 %v649, %v793
        %v795 = vpop.f32.mrb[0].mxu0
        %796 = vmatprep.mubr.bf16.mxu0 0
        %797 = vmatmul.mubr.bf16.gmra.mrb[0].mxu0 %v496
        %v798 = vpop.f32.mrb[0].mxu0
        %v799 = vadd.f32 %v654, %v798
        %v800 = vpop.f32.mrb[0].mxu0
        %v801 = vpop.f32.mrb[0].mxu0
        %v802 = vadd.f32 %v657, %v801
        %v803 = vpop.f32.mrb[0].mxu0
        %804 = vmatprep.mubr.bf16.mxu0 0
        %805 = vmatmul.mubr.bf16.gmra.mrb[0].mxu0 %v497
        %v806 = vpop.f32.mrb[0].mxu0
        %v807 = vadd.f32 %v662, %v806
        %v808 = vpop.f32.mrb[0].mxu0
        %v809 = vpop.f32.mrb[0].mxu0
        %v810 = vadd.f32 %v665, %v809
        %v811 = vpop.f32.mrb[0].mxu0
        %812 = vmatprep.mubr.bf16.mxu0 0
        %813 = vmatmul.mubr.bf16.gmra.mrb[0].mxu0 %v498
        %v814 = vpop.f32.mrb[0].mxu0
        %v815 = vadd.f32 %v670, %v814
        %v816 = vpop.f32.mrb[0].mxu0
        %v817 = vpop.f32.mrb[0].mxu0
        %v818 = vadd.f32 %v673, %v817
        %v819 = vpop.f32.mrb[0].mxu0
        %820 = vdwg.mxu0
        %v821 = vld [vmem:[%s244] sm:$0x1]
        %v823 = vlaneseq
        %v824 = vshrl.u32 %v823, 7
        %v825 = vsub.s32 0, %v824
        %v826 = vrot.slane %v821, %v825
        %v828 = vadd.f32 %v759, %v826
        %v829 = vadd.f32 %v762, %v826
        %v830 = vadd.f32 %v767, %v826
        %v831 = vadd.f32 %v770, %v826
        %v832 = vadd.f32 %v775, %v826
        %v833 = vadd.f32 %v778, %v826
        %v834 = vadd.f32 %v783, %v826
        %v835 = vadd.f32 %v786, %v826
        %v836 = vadd.f32 %v791, %v826
        %v837 = vadd.f32 %v794, %v826
        %v838 = vadd.f32 %v799, %v826
        %v839 = vadd.f32 %v802, %v826
        %v840 = vadd.f32 %v807, %v826
        %v841 = vadd.f32 %v810, %v826
        %v842 = vadd.f32 %v815, %v826
        %v843 = vadd.f32 %v818, %v826
        %p844 = scmp.lt.s32.totalorder %s18, 2
        // Predicated region
        $region53: #{tpu_custom_call.1} parent=35 // pred_check
          %p845 = pneg %p844
        $region54: #{tpu_custom_call.1} parent=35 // pred_check_branch
          %847 = sbr.rel (%p845) target = $region56
        $region55: #{tpu_custom_call.1} parent=35 // pred_region
          %v848 = vmax.f32 %v828, 0.0
          %v849 = vmax.f32 %v829, 0.0
          %v850 = vmax.f32 %v830, 0.0
          %v851 = vmax.f32 %v831, 0.0
          %v852 = vmax.f32 %v832, 0.0
          %v853 = vmax.f32 %v833, 0.0
          %v854 = vmax.f32 %v834, 0.0
          %v855 = vmax.f32 %v835, 0.0
          %v856 = vmax.f32 %v836, 0.0
          %v857 = vmax.f32 %v837, 0.0
          %v858 = vmax.f32 %v838, 0.0
          %v859 = vmax.f32 %v839, 0.0
          %v860 = vmax.f32 %v840, 0.0
          %v861 = vmax.f32 %v841, 0.0
          %v862 = vmax.f32 %v842, 0.0
          %v863 = vmax.f32 %v843, 0.0
          %v864 = vpack.c.bf16 %v849, %v848
          %v865 = vpack.c.bf16 %v851, %v850
          %v866 = vpack.c.bf16 %v853, %v852
          %v867 = vpack.c.bf16 %v855, %v854
          %v868 = vpack.c.bf16 %v857, %v856
          %v869 = vpack.c.bf16 %v859, %v858
          %v870 = vpack.c.bf16 %v861, %v860
          %v871 = vpack.c.bf16 %v863, %v862
          %872 = vst [vmem:[#allocation2] sm:$0xff] %v864
          %873 = vst [vmem:[#allocation2 + $0x8] sm:$0xff] %v865
          %874 = vst [vmem:[#allocation2 + $0x10] sm:$0xff] %v866
          %875 = vst [vmem:[#allocation2 + $0x18] sm:$0xff] %v867
          %876 = vst [vmem:[#allocation2 + $0x20] sm:$0xff] %v868
          %877 = vst [vmem:[#allocation2 + $0x28] sm:$0xff] %v869
          %878 = vst [vmem:[#allocation2 + $0x30] sm:$0xff] %v870
          %879 = vst [vmem:[#allocation2 + $0x38] sm:$0xff] %v871
        $region56: #{tpu_custom_call.1} parent=35 // pred_fallthru
          _
        %p880 = scmp.eq.s32.totalorder %s18, 2
        // Predicated region
        $region57: #{tpu_custom_call.1} parent=35 // pred_check
          %p881 = pneg %p880
        $region58: #{tpu_custom_call.1} parent=35 // pred_check_branch
          %883 = sbr.rel (%p881) target = $region60
        $region59: #{tpu_custom_call.1} parent=35 // pred_region
          %884 = vst [vmem:[#allocation9] sm:$0xff] %v828
          %885 = vst [vmem:[#allocation9 + $0x8] sm:$0xff] %v829
          %886 = vst [vmem:[#allocation9 + $0x10] sm:$0xff] %v830
          %887 = vst [vmem:[#allocation9 + $0x18] sm:$0xff] %v831
          %888 = vst [vmem:[#allocation9 + $0x20] sm:$0xff] %v832
          %889 = vst [vmem:[#allocation9 + $0x28] sm:$0xff] %v833
          %890 = vst [vmem:[#allocation9 + $0x30] sm:$0xff] %v834
          %891 = vst [vmem:[#allocation9 + $0x38] sm:$0xff] %v835
          %892 = vst [vmem:[#allocation9 + $0x40] sm:$0xff] %v836
          %893 = vst [vmem:[#allocation9 + $0x48] sm:$0xff] %v837
          %894 = vst [vmem:[#allocation9 + $0x50] sm:$0xff] %v838
          %895 = vst [vmem:[#allocation9 + $0x58] sm:$0xff] %v839
          %896 = vst [vmem:[#allocation9 + $0x60] sm:$0xff] %v840
          %897 = vst [vmem:[#allocation9 + $0x68] sm:$0xff] %v841
          %898 = vst [vmem:[#allocation9 + $0x70] sm:$0xff] %v842
          %899 = vst [vmem:[#allocation9 + $0x78] sm:$0xff] %v843
        $region60: #{tpu_custom_call.1} parent=35 // pred_fallthru
          _
        // Predicated region
        $region61: #{tpu_custom_call.1} parent=35 // pred_check
          %p900 = pneg %p125
        $region62: #{tpu_custom_call.1} parent=35 // pred_check_branch
          %902 = sbr.rel (%p900) target = $region64
        $region63: #{tpu_custom_call.1} parent=35 // pred_region
          %s904 = ssub.s32 2048, 2048
          %905 = vsyncadd [#allocation5], %s904
          %s906 = sshll.u32 [#allocation9], 4
          %s907 = int_to_ptr.vmem [resolvable:$true] %s906
          %912 = dma.vmem_to_hbm [thread:$0]  %s907, 2048, %s4, [#allocation5], 128, 128, 8
        $region64: #{tpu_custom_call.1} parent=35 // pred_fallthru
          _
        // Predicated region
        $region65: #{tpu_custom_call.1} parent=35 // pred_check
          %p913 = pneg %p125
        $region66: #{tpu_custom_call.1} parent=35 // pred_check_branch
          %915 = sbr.rel (%p913) target = $region68
        $region67: #{tpu_custom_call.1} parent=35 // pred_region
          %916 = dma.done [#allocation5], 2048
        $region68: #{tpu_custom_call.1} parent=35 // pred_fallthru
          _
      $region36: #{tpu_custom_call.1} parent=5 // pred_fallthru
        _
      %p917 = scmp.le.s32.totalorder 2, %s13
      // Predicated region
      $region69: #{tpu_custom_call.1} parent=5 // pred_check
        %p918 = pneg %p917
      $region70: #{tpu_custom_call.1} parent=5 // pred_check_branch
        %920 = sbr.rel (%p918) target = $region72
      $region71: #{tpu_custom_call.1} parent=5 // pred_region
        %s921 = ssub.s32 %s13, 2
      $region72: #{tpu_custom_call.1} parent=5 // pred_fallthru
        _
    $region6: #{tpu_custom_call.1} parent=1 // loop_footer
      %s17 = sadd.s32 1, %s13
    $region7: #{tpu_custom_call.1} parent=1 // loop_footer_branch
      %12 = sbr.rel target = $region3
    $region8: #{tpu_custom_call.1} parent=1 // loop_exit
      _
    %922 = vsyncpa [#allocation4], 1
    %s923 = scalar_lea.sflag [#allocation4], 1
    %924 = vsyncpa %s923, 1
    %925 = vsyncpa [#allocation7], 1
    %926 = vsyncpa [#allocation5], 1
    %s927 = scalar_lea.sflag [#allocation5], 1
    %928 = vsyncpa %s927, 1

// kernel: tpu_custom_call.1
$region0: #{tpu_custom_call.1}
  #allocation0 [shape = 'u32[]', space=smem, size = 0x4, offset = 0x4, fixed_abs, tag = 'smem constant byte address 0x4 - core index']
  #allocation1 [shape = 'u32[144,128]{1,0:T(1,128)}', space=vmem, size = 0x12000, scoped, tag = 'internal scratch']
  #allocation2 [shape = 'bf16[128,128]{1,0:T(16,128)(2,1)}', space=vmem, size = 0x8000, scoped, tag = 'scratch operand']
  %s0 = inlined_call_operand.hbm [shape: bf16[128,128], index: 0, kind: input, shape index: {}]
  %s1 = inlined_call_operand.hbm [shape: bf16[128,128], index: 1, kind: input, shape index: {}]
  %s2 = inlined_call_operand.hbm [shape: bf16[3,256,128], index: 2, kind: input, shape index: {}]
  %s3 = inlined_call_operand.vmem [shape: f32[3,1,128], index: 3, kind: input, shape index: {}]
  %s4 = inlined_call_operand.hbm [shape: f32[128,128], index: 4, kind: output, shape index: {}]
  %s5 = sld [smem:[#allocation0]]
  $region73: #{tpu_custom_call.1} parent=0
    _
  %s7 = ssub.s32 1, %s5
  %s8 = scalar_select 0, %s7, %s5
  $region1: #{tpu_custom_call.1} parent=0
    #allocation3 [shape = 'u8[32768]{0}', space=vmem, size = 0x8000, scoped, tag = 'input window, operand 0, single buffered']
    #allocation4 [shape = 's32[2]{0}', space=sflag, size = 0x8, scoped, tag = 'scoped memory for tpu_custom_call.1']
    #allocation5 [shape = 's32[2]{0}', space=sflag, size = 0x8, scoped, tag = 'scoped memory for tpu_custom_call.1']
    #allocation6 [shape = 'u8[32768]{0}', space=vmem, size = 0x8000, scoped, tag = 'input window, operand 1, single buffered']
    #allocation7 [shape = 's32[1]{0}', space=sflag, size = 0x4, scoped, tag = 'scoped memory for tpu_custom_call.1']
    #allocation8 [shape = 'u8[131072]{0}', space=vmem, size = 0x20000, scoped, tag = 'input window, operand 2']
    #allocation9 [shape = 'u8[65536]{0}', space=vmem, size = 0x10000, scoped, tag = 'output window, operand 0, single buffered']
    %9 = vsyncpa [#allocation4], 0
    %10 = vsyncpa [#allocation7], 0
    %11 = vsyncpa [#allocation5], 0
    loop: start=0, step=1, limit=5
    $region2: #{tpu_custom_call.1} parent=1 // loop_pre_header
      _
    $region3: #{tpu_custom_call.1} parent=1 // loop_header
      %s13 = sphi 0, %s17
      %p14 = scmp.ge.s32.totalorder %s13, 5
      %s21 = sphi 0, %s21
      %s23 = sphi 0, %s21
      %s24 = sphi 0, %s23
      %s38 = sphi 0, %s24
      %s42 = sphi 0, %s42
      %s44 = sphi 0, %s42
      %s45 = sphi 0, %s44
      %s59 = sphi 0, %s45
      %s65 = sphi 0, %s67
      %s68 = sphi 0, %s65
      %s69 = sphi 0, %s68
      %s85 = sphi 0, %s69
      %s91 = sphi 0, %s93
      %s94 = sphi 0, %s91
      %s95 = sphi 0, %s94
      %s111 = sphi 0, %s95
      %s115 = sphi 0, %s115
      %s117 = sphi 0, %s115
      %s118 = sphi 0, %s117
      %s132 = sphi 0, %s118
    $region4: #{tpu_custom_call.1} parent=1 // loop_header_branch
      %16 = sbr.rel (%p14) target = $region8
    $region5: #{tpu_custom_call.1} parent=1 // loop_body
      %s18 = ssub.s32 %s13, 1
      %s19 = ssub.s32 %s13, 2
      %s20 = sadd.s32 %s13, 1
      %s22 = sadd.s32 %s21, 1
      %p25 = scmp.eq.s32.totalorder %s13, 2
      %p26 = scmp.ne.s32.totalorder %s21, %s23
      %p27 = scmp.eq.s32.totalorder %s13, 0
      %p28 = por %p26, %p27
      %p29 = scmp.ne.s32.totalorder %s21, %s23
      %p30 = scmp.eq.s32.totalorder %s18, 2
      %p31 = por %p29, %p30
      %p32 = scmp.ne.s32.totalorder %s23, %s24
      %p33 = scmp.eq.s32.totalorder %s18, 0
      %p34 = por %p32, %p33
      %p35 = scmp.ne.s32.totalorder %s23, %s24
      %p36 = scmp.eq.s32.totalorder %s19, 2
      %p37 = por %p35, %p36
      %p39 = scmp.ne.s32.totalorder %s24, %s38
      %p40 = scmp.eq.s32.totalorder %s19, 0
      %p41 = por %p39, %p40
      %s43 = sadd.s32 %s42, 1
      %p46 = scmp.eq.s32.totalorder %s13, 2
      %p47 = scmp.ne.s32.totalorder %s42, %s44
      %p48 = scmp.eq.s32.totalorder %s13, 0
      %p49 = por %p47, %p48
      %p50 = scmp.ne.s32.totalorder %s42, %s44
      %p51 = scmp.eq.s32.totalorder %s18, 2
      %p52 = por %p50, %p51
      %p53 = scmp.ne.s32.totalorder %s44, %s45
      %p54 = scmp.eq.s32.totalorder %s18, 0
      %p55 = por %p53, %p54
      %p56 = scmp.ne.s32.totalorder %s44, %s45
      %p57 = scmp.eq.s32.totalorder %s19, 2
      %p58 = por %p56, %p57
      %p60 = scmp.ne.s32.totalorder %s45, %s59
      %p61 = scmp.eq.s32.totalorder %s19, 0
      %p62 = por %p60, %p61
      %s63 = ssub.s32 %s13, %s20
      %p64 = scmp.eq.s32.totalorder %s63, 0
      %s66 = sadd.s32 %s65, 1
      %s67 = scalar_select %p64, %s65, %s66
      %p70 = pneg %p64
      %p71 = scmp.eq.s32.totalorder %s13, 2
      %p72 = por %p70, %p71
      %p73 = scmp.ne.s32.totalorder %s65, %s68
      %p74 = scmp.eq.s32.totalorder %s13, 0
      %p75 = por %p73, %p74
      %p76 = scmp.ne.s32.totalorder %s65, %s68
      %p77 = scmp.eq.s32.totalorder %s18, 2
      %p78 = por %p76, %p77
      %p79 = scmp.ne.s32.totalorder %s68, %s69
      %p80 = scmp.eq.s32.totalorder %s18, 0
      %p81 = por %p79, %p80
      %p82 = scmp.ne.s32.totalorder %s68, %s69
      %p83 = scmp.eq.s32.totalorder %s19, 2
      %p84 = por %p82, %p83
      %p86 = scmp.ne.s32.totalorder %s69, %s85
      %p87 = scmp.eq.s32.totalorder %s19, 0
      %p88 = por %p86, %p87
      %s89 = ssub.s32 %s13, %s20
      %p90 = scmp.eq.s32.totalorder %s89, 0
      %s92 = sadd.s32 %s91, 1
      %s93 = scalar_select %p90, %s91, %s92
      %p96 = pneg %p90
      %p97 = scmp.eq.s32.totalorder %s13, 2
      %p98 = por %p96, %p97
      %p99 = scmp.ne.s32.totalorder %s91, %s94
      %p100 = scmp.eq.s32.totalorder %s13, 0
      %p101 = por %p99, %p100
      %p102 = scmp.ne.s32.totalorder %s91, %s94
      %p103 = scmp.eq.s32.totalorder %s18, 2
      %p104 = por %p102, %p103
      %p105 = scmp.ne.s32.totalorder %s94, %s95
      %p106 = scmp.eq.s32.totalorder %s18, 0
      %p107 = por %p105, %p106
      %p108 = scmp.ne.s32.totalorder %s94, %s95
      %p109 = scmp.eq.s32.totalorder %s19, 2
      %p110 = por %p108, %p109
      %p112 = scmp.ne.s32.totalorder %s95, %s111
      %p113 = scmp.eq.s32.totalorder %s19, 0
      %p114 = por %p112, %p113
      %s116 = sadd.s32 %s115, 1
      %p119 = scmp.eq.s32.totalorder %s13, 2
      %p120 = scmp.ne.s32.totalorder %s115, %s117
      %p121 = scmp.eq.s32.totalorder %s13, 0
      %p122 = por %p120, %p121
      %p123 = scmp.ne.s32.totalorder %s115, %s117
      %p124 = scmp.eq.s32.totalorder %s18, 2
      %p125 = por %p123, %p124
      %p126 = scmp.ne.s32.totalorder %s117, %s118
      %p127 = scmp.eq.s32.totalorder %s18, 0
      %p128 = por %p126, %p127
      %p129 = scmp.ne.s32.totalorder %s117, %s118
      %p130 = scmp.eq.s32.totalorder %s19, 2
      %p131 = por %p129, %p130
      %p133 = scmp.ne.s32.totalorder %s118, %s132
      %p134 = scmp.eq.s32.totalorder %s19, 0
      %p135 = por %p133, %p134
      %p136 = scmp.le.s32.totalorder 1, %s13
      %p137 = scmp.lt.s32.totalorder %s13, 4
      %p138 = pnand %p136, %p137
      %p139 = pneg %p138
      // Predicated region
      $region9: #{tpu_custom_call.1} parent=5 // pred_check
        _
      $region10: #{tpu_custom_call.1} parent=5 // pred_check_branch
        %141 = sbr.rel (%p138) target = $region12
      $region11: #{tpu_custom_call.1} parent=5 // pred_region
        %s142 = ssub.s32 %s13, 1
        // Predicated region
        $region13: #{tpu_custom_call.1} parent=11 // pred_check
          %p143 = pneg %p34
        $region14: #{tpu_custom_call.1} parent=11 // pred_check_branch
          %145 = sbr.rel (%p143) target = $region16
        $region15: #{tpu_custom_call.1} parent=11 // pred_region
          %s147 = ssub.s32 1024, 1024
          %148 = vsyncadd [#allocation4], %s147
          %s149 = sshll.u32 [#allocation3], 4
          %s150 = int_to_ptr.vmem [resolvable:$true] %s149
          %155 = dma.hbm_to_vmem [thread:$0]  %s0, 1024, %s150, [#allocation4], 64, 64, 4
        $region16: #{tpu_custom_call.1} parent=11 // pred_fallthru
          _
        // Predicated region
        $region17: #{tpu_custom_call.1} parent=11 // pred_check
          %p156 = pneg %p55
        $region18: #{tpu_custom_call.1} parent=11 // pred_check_branch
          %158 = sbr.rel (%p156) target = $region20
        $region19: #{tpu_custom_call.1} parent=11 // pred_region
          %s160 = ssub.s32 1024, 1024
          %161 = vsyncadd [#allocation7], %s160
          %s162 = sshll.u32 [#allocation6], 4
          %s163 = int_to_ptr.vmem [resolvable:$true] %s162
          %168 = dma.hbm_to_vmem [thread:$0]  %s1, 1024, %s163, [#allocation7], 64, 64, 4
        $region20: #{tpu_custom_call.1} parent=11 // pred_fallthru
          _
      $region12: #{tpu_custom_call.1} parent=5 // pred_fallthru
        _
      %p169 = scmp.lt.s32.totalorder %s13, 3
      // Predicated region
      $region21: #{tpu_custom_call.1} parent=5 // pred_check
        %p170 = pneg %p169
      $region22: #{tpu_custom_call.1} parent=5 // pred_check_branch
        %172 = sbr.rel (%p170) target = $region24
      $region23: #{tpu_custom_call.1} parent=5 // pred_region
        // Predicated region
        $region25: #{tpu_custom_call.1} parent=23 // pred_check
          %p173 = pneg %p75
        $region26: #{tpu_custom_call.1} parent=23 // pred_check_branch
          %175 = sbr.rel (%p173) target = $region28
        $region27: #{tpu_custom_call.1} parent=23 // pred_region
          %s176 = sand.u32 %s13, 1
          %s177 = scalar_lea.sflag [#allocation4], %s176
          %s178 = sand.u32 %s65, 1
          %s179 = smul.addr %s178, 128
          %s180 = scalar_lea.vmem [#allocation8], %s179
          %s182 = ssub.s32 2048, 2048
          %183 = vsyncadd %s177, %s182
          %s184 = smul.addr %s13, 32
          %s185 = smul.addr %s184, 64
          %s186 = scalar_lea.hbm %s2, %s185
          %s187 = sshll.u32 %s180, 4
          %s188 = int_to_ptr.vmem [resolvable:$true] %s187
          %193 = dma.hbm_to_vmem [thread:$0]  %s186, 2048, %s188, %s177, 64, 64, 4
        $region28: #{tpu_custom_call.1} parent=23 // pred_fallthru
          _
        // Predicated region
        $region29: #{tpu_custom_call.1} parent=23 // pred_check
          %p194 = pneg %p101
        $region30: #{tpu_custom_call.1} parent=23 // pred_check_branch
          %196 = sbr.rel (%p194) target = $region32
        $region31: #{tpu_custom_call.1} parent=23 // pred_region
          %p197 = scmp.lt.s32.totalorder %s13, 2
          %s198 = scalar_select %p197, %s13, 2
          %s199 = scalar_lea.vmem %s3, %s198
        $region32: #{tpu_custom_call.1} parent=23 // pred_fallthru
          _
      $region24: #{tpu_custom_call.1} parent=5 // pred_fallthru
        _
      %p200 = scmp.le.s32.totalorder 1, %s13
      %p201 = scmp.lt.s32.totalorder %s13, 4
      %p202 = pnand %p200, %p201
      %p203 = pneg %p202
      // Predicated region
      $region33: #{tpu_custom_call.1} parent=5 // pred_check
        _
      $region34: #{tpu_custom_call.1} parent=5 // pred_check_branch
        %205 = sbr.rel (%p202) target = $region36
      $region35: #{tpu_custom_call.1} parent=5 // pred_region
        %s206 = ssub.s32 %s13, 1
        // Predicated region
        $region37: #{tpu_custom_call.1} parent=35 // pred_check
          %p207 = pneg %p34
        $region38: #{tpu_custom_call.1} parent=35 // pred_check_branch
          %209 = sbr.rel (%p207) target = $region40
        $region39: #{tpu_custom_call.1} parent=35 // pred_region
          %210 = dma.done [#allocation4], 1024
        $region40: #{tpu_custom_call.1} parent=35 // pred_fallthru
          _
        // Predicated region
        $region41: #{tpu_custom_call.1} parent=35 // pred_check
          %p211 = pneg %p55
        $region42: #{tpu_custom_call.1} parent=35 // pred_check_branch
          %213 = sbr.rel (%p211) target = $region44
        $region43: #{tpu_custom_call.1} parent=35 // pred_region
          %214 = dma.done [#allocation7], 1024
        $region44: #{tpu_custom_call.1} parent=35 // pred_fallthru
          _
        %s215 = sand.u32 %s18, 1
        %s216 = scalar_lea.sflag [#allocation4], %s215
        %s217 = sand.u32 %s68, 1
        %s218 = smul.addr %s217, 128
        %s219 = scalar_lea.vmem [#allocation8], %s218
        // Predicated region
        $region45: #{tpu_custom_call.1} parent=35 // pred_check
          %p220 = pneg %p81
        $region46: #{tpu_custom_call.1} parent=35 // pred_check_branch
          %222 = sbr.rel (%p220) target = $region48
        $region47: #{tpu_custom_call.1} parent=35 // pred_region
          %223 = dma.done %s216, 2048
        $region48: #{tpu_custom_call.1} parent=35 // pred_fallthru
          _
        %p224 = pneg %p34
        %p225 = pneg %p31
        %p226 = pneg %p55
        %p227 = pneg %p52
        %s228 = sand.u32 %s18, 1
        %s229 = scalar_lea.sflag [#allocation4], %s228
        %s230 = sand.u32 %s68, 1
        %s231 = smul.addr %s230, 128
        %s232 = scalar_lea.vmem [#allocation8], %s231
        %p233 = pneg %p81
        %p234 = pneg %p78
        %p235 = scmp.lt.s32.totalorder %s18, 2
        %s236 = scalar_select %p235, %s18, 2
        %s237 = scalar_lea.vmem %s3, %s236
        %p238 = pneg %p107
        %p239 = pneg %p104
        %p240 = pneg %p128
        %p241 = pneg %p125
        %p242 = scmp.lt.s32.totalorder %s18, 2
        %s243 = scalar_select %p242, %s18, 2
        %s244 = scalar_lea.vmem %s3, %s243
        %p246 = scmp.eq.s32.totalorder %s18, 0
        // Predicated region
        $region49: #{tpu_custom_call.1} parent=35 // pred_check
          %p247 = pneg %p246
        $region50: #{tpu_custom_call.1} parent=35 // pred_check_branch
          %249 = sbr.rel (%p247) target = $region52
        $region51: #{tpu_custom_call.1} parent=35 // pred_region
          %v250 = vld [vmem:[#allocation6] sm:$0xf]
          %v251 = vld [vmem:[#allocation6 + $0x4] sm:$0xf]
          %v252 = vld [vmem:[#allocation6 + $0x8] sm:$0xf]
          %v253 = vld [vmem:[#allocation6 + $0xc] sm:$0xf]
          %v254 = vld [vmem:[#allocation6 + $0x10] sm:$0xf]
          %v255 = vld [vmem:[#allocation6 + $0x14] sm:$0xf]
          %v256 = vld [vmem:[#allocation6 + $0x18] sm:$0xf]
          %v257 = vld [vmem:[#allocation6 + $0x1c] sm:$0xf]
          %v258 = vld [vmem:[#allocation6 + $0x20] sm:$0xf]
          %v259 = vld [vmem:[#allocation6 + $0x24] sm:$0xf]
          %v260 = vld [vmem:[#allocation6 + $0x28] sm:$0xf]
          %v261 = vld [vmem:[#allocation6 + $0x2c] sm:$0xf]
          %v262 = vld [vmem:[#allocation6 + $0x30] sm:$0xf]
          %v263 = vld [vmem:[#allocation6 + $0x34] sm:$0xf]
          %v264 = vld [vmem:[#allocation6 + $0x38] sm:$0xf]
          %v265 = vld [vmem:[#allocation6 + $0x3c] sm:$0xf]
          %v282 = vunpack.c.l.b16 %v250
          %v283 = vunpack.c.l.b16 %v251
          %v284 = vunpack.c.l.b16 %v252
          %v285 = vunpack.c.l.b16 %v253
          %v286 = vunpack.c.l.b16 %v254
          %v287 = vunpack.c.l.b16 %v255
          %v288 = vunpack.c.l.b16 %v256
          %v289 = vunpack.c.l.b16 %v257
          %v290 = vunpack.c.l.b16 %v258
          %v291 = vunpack.c.l.b16 %v259
          %v292 = vunpack.c.l.b16 %v260
          %v293 = vunpack.c.l.b16 %v261
          %v294 = vunpack.c.l.b16 %v262
          %v295 = vunpack.c.l.b16 %v263
          %v296 = vunpack.c.l.b16 %v264
          %v297 = vunpack.c.l.b16 %v265
          %v298 = vpack.c.b16 %v283, %v282
          %v299 = vpack.c.b16 %v285, %v284
          %v300 = vpack.c.b16 %v287, %v286
          %v301 = vpack.c.b16 %v289, %v288
          %v302 = vpack.c.b16 %v291, %v290
          %v303 = vpack.c.b16 %v293, %v292
          %v304 = vpack.c.b16 %v295, %v294
          %v305 = vpack.c.b16 %v297, %v296
          %314 = vst [vmem:[#allocation2] sm:$0xff] %v298
          %315 = vst [vmem:[#allocation2 + $0x8] sm:$0xff] %v299
          %316 = vst [vmem:[#allocation2 + $0x10] sm:$0xff] %v300
          %317 = vst [vmem:[#allocation2 + $0x18] sm:$0xff] %v301
          %318 = vst [vmem:[#allocation2 + $0x20] sm:$0xff] %v302
          %319 = vst [vmem:[#allocation2 + $0x28] sm:$0xff] %v303
          %320 = vst [vmem:[#allocation2 + $0x30] sm:$0xff] %v304
          %321 = vst [vmem:[#allocation2 + $0x38] sm:$0xff] %v305
        $region52: #{tpu_custom_call.1} parent=35 // pred_fallthru
          _
        %v322 = vld [vmem:[#allocation2] sm:$0xff]
        %v323 = vld [vmem:[#allocation2 + $0x8] sm:$0xff]
        %v324 = vld [vmem:[#allocation2 + $0x10] sm:$0xff]
        %v325 = vld [vmem:[#allocation2 + $0x18] sm:$0xff]
        %v326 = vld [vmem:[#allocation2 + $0x20] sm:$0xff]
        %v327 = vld [vmem:[#allocation2 + $0x28] sm:$0xff]
        %v328 = vld [vmem:[#allocation2 + $0x30] sm:$0xff]
        %v329 = vld [vmem:[#allocation2 + $0x38] sm:$0xff]
        %v330 = vld [vmem:[#allocation3] sm:$0xf]
        %v331 = vld [vmem:[#allocation3 + $0x4] sm:$0xf]
        %v332 = vld [vmem:[#allocation3 + $0x8] sm:$0xf]
        %v333 = vld [vmem:[#allocation3 + $0xc] sm:$0xf]
        %v334 = vld [vmem:[#allocation3 + $0x10] sm:$0xf]
        %v335 = vld [vmem:[#allocation3 + $0x14] sm:$0xf]
        %v336 = vld [vmem:[#allocation3 + $0x18] sm:$0xf]
        %v337 = vld [vmem:[#allocation3 + $0x1c] sm:$0xf]
        %v338 = vld [vmem:[#allocation3 + $0x20] sm:$0xf]
        %v339 = vld [vmem:[#allocation3 + $0x24] sm:$0xf]
        %v340 = vld [vmem:[#allocation3 + $0x28] sm:$0xf]
        %v341 = vld [vmem:[#allocation3 + $0x2c] sm:$0xf]
        %v342 = vld [vmem:[#allocation3 + $0x30] sm:$0xf]
        %v343 = vld [vmem:[#allocation3 + $0x34] sm:$0xf]
        %v344 = vld [vmem:[#allocation3 + $0x38] sm:$0xf]
        %v345 = vld [vmem:[#allocation3 + $0x3c] sm:$0xf]
        %v362 = vunpack.c.l.b16 %v330
        %v363 = vunpack.c.l.b16 %v331
        %v364 = vunpack.c.l.b16 %v332
        %v365 = vunpack.c.l.b16 %v333
        %v366 = vunpack.c.l.b16 %v334
        %v367 = vunpack.c.l.b16 %v335
        %v368 = vunpack.c.l.b16 %v336
        %v369 = vunpack.c.l.b16 %v337
        %v370 = vunpack.c.l.b16 %v338
        %v371 = vunpack.c.l.b16 %v339
        %v372 = vunpack.c.l.b16 %v340
        %v373 = vunpack.c.l.b16 %v341
        %v374 = vunpack.c.l.b16 %v342
        %v375 = vunpack.c.l.b16 %v343
        %v376 = vunpack.c.l.b16 %v344
        %v377 = vunpack.c.l.b16 %v345
        %v378 = vpack.c.b16 %v363, %v362
        %v379 = vpack.c.b16 %v365, %v364
        %v380 = vpack.c.b16 %v367, %v366
        %v381 = vpack.c.b16 %v369, %v368
        %v382 = vpack.c.b16 %v371, %v370
        %v383 = vpack.c.b16 %v373, %v372
        %v384 = vpack.c.b16 %v375, %v374
        %v385 = vpack.c.b16 %v377, %v376
        %394 = vmatprep.subr.bf16.mxu0 0
        %395 = vmatpush1.bf16.msra.mxu0 %v322
        %396 = vmatprep.subr.bf16.mxu0 0
        %397 = vmatpush1.bf16.msra.mxu0 %v323
        %398 = vmatprep.subr.bf16.mxu0 0
        %399 = vmatpush1.bf16.msra.mxu0 %v324
        %400 = vmatprep.subr.bf16.mxu0 0
        %401 = vmatpush1.bf16.msra.mxu0 %v325
        %402 = vmatprep.subr.bf16.mxu0 0
        %403 = vmatpush1.bf16.msra.mxu0 %v326
        %404 = vmatprep.subr.bf16.mxu0 0
        %405 = vmatpush1.bf16.msra.mxu0 %v327
        %406 = vmatprep.subr.bf16.mxu0 0
        %407 = vmatpush1.bf16.msra.mxu0 %v328
        %408 = vmatprep.subr.bf16.mxu0 0
        %409 = vmatpush1.bf16.msra.mxu0 %v329
        %410 = vmatprep.subr.bf16.mxu0 0
        %411 = vmatpush1.bf16.msra.mxu0 0
        %412 = vmatprep.subr.bf16.mxu0 0
        %413 = vmatpush1.bf16.msra.mxu0 0
        %414 = vmatprep.subr.bf16.mxu0 0
        %415 = vmatpush1.bf16.msra.mxu0 0
        %416 = vmatprep.subr.bf16.mxu0 0
        %417 = vmatpush1.bf16.msra.mxu0 0
        %418 = vmatprep.subr.bf16.mxu0 0
        %419 = vmatpush1.bf16.msra.mxu0 0
        %420 = vmatprep.subr.bf16.mxu0 0
        %421 = vmatpush1.bf16.msra.mxu0 0
        %422 = vmatprep.subr.bf16.mxu0 0
        %423 = vmatpush1.bf16.msra.mxu0 0
        %424 = vmatprep.subr.bf16.mxu0 0
        %425 = vmatpush1.bf16.msra.mxu0 0
        %426 = vmatprep.mubr.bf16.mxu0 0
        %427 = vmatmul.mubr.bf16.gmra.mrb[0].mxu0 %v378
        %v428 = vpop.f32.mrb[0].mxu0
        %v429 = vadd.f32 0.0, %v428
        %v430 = vpop.f32.mrb[0].mxu0
        %v431 = vpop.f32.mrb[0].mxu0
        %v432 = vadd.f32 0.0, %v431
        %v433 = vpop.f32.mrb[0].mxu0
        %434 = vmatprep.mubr.bf16.mxu0 0
        %435 = vmatmul.mubr.bf16.gmra.mrb[0].mxu0 %v379
        %v436 = vpop.f32.mrb[0].mxu0
        %v437 = vadd.f32 0.0, %v436
        %v438 = vpop.f32.mrb[0].mxu0
        %v439 = vpop.f32.mrb[0].mxu0
        %v440 = vadd.f32 0.0, %v439
        %v441 = vpop.f32.mrb[0].mxu0
        %442 = vmatprep.mubr.bf16.mxu0 0
        %443 = vmatmul.mubr.bf16.gmra.mrb[0].mxu0 %v380
        %v444 = vpop.f32.mrb[0].mxu0
        %v445 = vadd.f32 0.0, %v444
        %v446 = vpop.f32.mrb[0].mxu0
        %v447 = vpop.f32.mrb[0].mxu0
        %v448 = vadd.f32 0.0, %v447
        %v449 = vpop.f32.mrb[0].mxu0
        %450 = vmatprep.mubr.bf16.mxu0 0
        %451 = vmatmul.mubr.bf16.gmra.mrb[0].mxu0 %v381
        %v452 = vpop.f32.mrb[0].mxu0
        %v453 = vadd.f32 0.0, %v452
        %v454 = vpop.f32.mrb[0].mxu0
        %v455 = vpop.f32.mrb[0].mxu0
        %v456 = vadd.f32 0.0, %v455
        %v457 = vpop.f32.mrb[0].mxu0
        %458 = vmatprep.mubr.bf16.mxu0 0
        %459 = vmatmul.mubr.bf16.gmra.mrb[0].mxu0 %v382
        %v460 = vpop.f32.mrb[0].mxu0
        %v461 = vadd.f32 0.0, %v460
        %v462 = vpop.f32.mrb[0].mxu0
        %v463 = vpop.f32.mrb[0].mxu0
        %v464 = vadd.f32 0.0, %v463
        %v465 = vpop.f32.mrb[0].mxu0
        %466 = vmatprep.mubr.bf16.mxu0 0
        %467 = vmatmul.mubr.bf16.gmra.mrb[0].mxu0 %v383
        %v468 = vpop.f32.mrb[0].mxu0
        %v469 = vadd.f32 0.0, %v468
        %v470 = vpop.f32.mrb[0].mxu0
        %v471 = vpop.f32.mrb[0].mxu0
        %v472 = vadd.f32 0.0, %v471
        %v473 = vpop.f32.mrb[0].mxu0
        %474 = vmatprep.mubr.bf16.mxu0 0
        %475 = vmatmul.mubr.bf16.gmra.mrb[0].mxu0 %v384
        %v476 = vpop.f32.mrb[0].mxu0
        %v477 = vadd.f32 0.0, %v476
        %v478 = vpop.f32.mrb[0].mxu0
        %v479 = vpop.f32.mrb[0].mxu0
        %v480 = vadd.f32 0.0, %v479
        %v481 = vpop.f32.mrb[0].mxu0
        %482 = vmatprep.mubr.bf16.mxu0 0
        %483 = vmatmul.mubr.bf16.gmra.mrb[0].mxu0 %v385
        %v484 = vpop.f32.mrb[0].mxu0
        %v485 = vadd.f32 0.0, %v484
        %v486 = vpop.f32.mrb[0].mxu0
        %v487 = vpop.f32.mrb[0].mxu0
        %v488 = vadd.f32 0.0, %v487
        %v489 = vpop.f32.mrb[0].mxu0
        %490 = vdwg.mxu0
        %v491 = vpack.c.bf16 %v432, %v429
        %v492 = vpack.c.bf16 %v440, %v437
        %v493 = vpack.c.bf16 %v448, %v445
        %v494 = vpack.c.bf16 %v456, %v453
        %v495 = vpack.c.bf16 %v464, %v461
        %v496 = vpack.c.bf16 %v472, %v469
        %v497 = vpack.c.bf16 %v480, %v477
        %v498 = vpack.c.bf16 %v488, %v485
        %v499 = vld [vmem:[%s219] sm:$0xf]
        %v500 = vld [vmem:[%s219 + $0x4] sm:$0xf]
        %v501 = vld [vmem:[%s219 + $0x8] sm:$0xf]
        %v502 = vld [vmem:[%s219 + $0xc] sm:$0xf]
        %v503 = vld [vmem:[%s219 + $0x10] sm:$0xf]
        %v504 = vld [vmem:[%s219 + $0x14] sm:$0xf]
        %v505 = vld [vmem:[%s219 + $0x18] sm:$0xf]
        %v506 = vld [vmem:[%s219 + $0x1c] sm:$0xf]
        %v507 = vld [vmem:[%s219 + $0x20] sm:$0xf]
        %v508 = vld [vmem:[%s219 + $0x24] sm:$0xf]
        %v509 = vld [vmem:[%s219 + $0x28] sm:$0xf]
        %v510 = vld [vmem:[%s219 + $0x2c] sm:$0xf]
        %v511 = vld [vmem:[%s219 + $0x30] sm:$0xf]
        %v512 = vld [vmem:[%s219 + $0x34] sm:$0xf]
        %v513 = vld [vmem:[%s219 + $0x38] sm:$0xf]
        %v514 = vld [vmem:[%s219 + $0x3c] sm:$0xf]
        %v515 = vld [vmem:[%s219 + $0x40] sm:$0xf]
        %v516 = vld [vmem:[%s219 + $0x44] sm:$0xf]
        %v517 = vld [vmem:[%s219 + $0x48] sm:$0xf]
        %v518 = vld [vmem:[%s219 + $0x4c] sm:$0xf]
        %v519 = vld [vmem:[%s219 + $0x50] sm:$0xf]
        %v520 = vld [vmem:[%s219 + $0x54] sm:$0xf]
        %v521 = vld [vmem:[%s219 + $0x58] sm:$0xf]
        %v522 = vld [vmem:[%s219 + $0x5c] sm:$0xf]
        %v523 = vld [vmem:[%s219 + $0x60] sm:$0xf]
        %v524 = vld [vmem:[%s219 + $0x64] sm:$0xf]
        %v525 = vld [vmem:[%s219 + $0x68] sm:$0xf]
        %v526 = vld [vmem:[%s219 + $0x6c] sm:$0xf]
        %v527 = vld [vmem:[%s219 + $0x70] sm:$0xf]
        %v528 = vld [vmem:[%s219 + $0x74] sm:$0xf]
        %v529 = vld [vmem:[%s219 + $0x78] sm:$0xf]
        %v530 = vld [vmem:[%s219 + $0x7c] sm:$0xf]
        %v547 = vunpack.c.l.b16 %v515
        %v548 = vunpack.c.l.b16 %v516
        %v549 = vunpack.c.l.b16 %v517
        %v550 = vunpack.c.l.b16 %v518
        %v551 = vunpack.c.l.b16 %v519
        %v552 = vunpack.c.l.b16 %v520
        %v553 = vunpack.c.l.b16 %v521
        %v554 = vunpack.c.l.b16 %v522
        %v555 = vunpack.c.l.b16 %v523
        %v556 = vunpack.c.l.b16 %v524
        %v557 = vunpack.c.l.b16 %v525
        %v558 = vunpack.c.l.b16 %v526
        %v559 = vunpack.c.l.b16 %v527
        %v560 = vunpack.c.l.b16 %v528
        %v561 = vunpack.c.l.b16 %v529
        %v562 = vunpack.c.l.b16 %v530
        %v563 = vpack.c.b16 %v548, %v547
        %v564 = vpack.c.b16 %v550, %v549
        %v565 = vpack.c.b16 %v552, %v551
        %v566 = vpack.c.b16 %v554, %v553
        %v567 = vpack.c.b16 %v556, %v555
        %v568 = vpack.c.b16 %v558, %v557
        %v569 = vpack.c.b16 %v560, %v559
        %v570 = vpack.c.b16 %v562, %v561
        %579 = vmatprep.subr.bf16.mxu0 0
        %580 = vmatpush1.bf16.msra.mxu0 %v563
        %581 = vmatprep.subr.bf16.mxu0 0
        %582 = vmatpush1.bf16.msra.mxu0 %v564
        %583 = vmatprep.subr.bf16.mxu0 0
        %584 = vmatpush1.bf16.msra.mxu0 %v565
        %585 = vmatprep.subr.bf16.mxu0 0
        %586 = vmatpush1.bf16.msra.mxu0 %v566
        %587 = vmatprep.subr.bf16.mxu0 0
        %588 = vmatpush1.bf16.msra.mxu0 %v567
        %589 = vmatprep.subr.bf16.mxu0 0
        %590 = vmatpush1.bf16.msra.mxu0 %v568
        %591 = vmatprep.subr.bf16.mxu0 0
        %592 = vmatpush1.bf16.msra.mxu0 %v569
        %593 = vmatprep.subr.bf16.mxu0 0
        %594 = vmatpush1.bf16.msra.mxu0 %v570
        %595 = vmatprep.subr.bf16.mxu0 0
        %596 = vmatpush1.bf16.msra.mxu0 0
        %597 = vmatprep.subr.bf16.mxu0 0
        %598 = vmatpush1.bf16.msra.mxu0 0
        %599 = vmatprep.subr.bf16.mxu0 0
        %600 = vmatpush1.bf16.msra.mxu0 0
        %601 = vmatprep.subr.bf16.mxu0 0
        %602 = vmatpush1.bf16.msra.mxu0 0
        %603 = vmatprep.subr.bf16.mxu0 0
        %604 = vmatpush1.bf16.msra.mxu0 0
        %605 = vmatprep.subr.bf16.mxu0 0
        %606 = vmatpush1.bf16.msra.mxu0 0
        %607 = vmatprep.subr.bf16.mxu0 0
        %608 = vmatpush1.bf16.msra.mxu0 0
        %609 = vmatprep.subr.bf16.mxu0 0
        %610 = vmatpush1.bf16.msra.mxu0 0
        %611 = vmatprep.mubr.bf16.mxu0 0
        %612 = vmatmul.mubr.bf16.gmra.mrb[0].mxu0 %v322
        %v613 = vpop.f32.mrb[0].mxu0
        %v614 = vadd.f32 0.0, %v613
        %v615 = vpop.f32.mrb[0].mxu0
        %v616 = vpop.f32.mrb[0].mxu0
        %v617 = vadd.f32 0.0, %v616
        %v618 = vpop.f32.mrb[0].mxu0
        %619 = vmatprep.mubr.bf16.mxu0 0
        %620 = vmatmul.mubr.bf16.gmra.mrb[0].mxu0 %v323
        %v621 = vpop.f32.mrb[0].mxu0
        %v622 = vadd.f32 0.0, %v621
        %v623 = vpop.f32.mrb[0].mxu0
        %v624 = vpop.f32.mrb[0].mxu0
        %v625 = vadd.f32 0.0, %v624
        %v626 = vpop.f32.mrb[0].mxu0
        %627 = vmatprep.mubr.bf16.mxu0 0
        %628 = vmatmul.mubr.bf16.gmra.mrb[0].mxu0 %v324
        %v629 = vpop.f32.mrb[0].mxu0
        %v630 = vadd.f32 0.0, %v629
        %v631 = vpop.f32.mrb[0].mxu0
        %v632 = vpop.f32.mrb[0].mxu0
        %v633 = vadd.f32 0.0, %v632
        %v634 = vpop.f32.mrb[0].mxu0
        %635 = vmatprep.mubr.bf16.mxu0 0
        %636 = vmatmul.mubr.bf16.gmra.mrb[0].mxu0 %v325
        %v637 = vpop.f32.mrb[0].mxu0
        %v638 = vadd.f32 0.0, %v637
        %v639 = vpop.f32.mrb[0].mxu0
        %v640 = vpop.f32.mrb[0].mxu0
        %v641 = vadd.f32 0.0, %v640
        %v642 = vpop.f32.mrb[0].mxu0
        %643 = vmatprep.mubr.bf16.mxu0 0
        %644 = vmatmul.mubr.bf16.gmra.mrb[0].mxu0 %v326
        %v645 = vpop.f32.mrb[0].mxu0
        %v646 = vadd.f32 0.0, %v645
        %v647 = vpop.f32.mrb[0].mxu0
        %v648 = vpop.f32.mrb[0].mxu0
        %v649 = vadd.f32 0.0, %v648
        %v650 = vpop.f32.mrb[0].mxu0
        %651 = vmatprep.mubr.bf16.mxu0 0
        %652 = vmatmul.mubr.bf16.gmra.mrb[0].mxu0 %v327
        %v653 = vpop.f32.mrb[0].mxu0
        %v654 = vadd.f32 0.0, %v653
        %v655 = vpop.f32.mrb[0].mxu0
        %v656 = vpop.f32.mrb[0].mxu0
        %v657 = vadd.f32 0.0, %v656
        %v658 = vpop.f32.mrb[0].mxu0
        %659 = vmatprep.mubr.bf16.mxu0 0
        %660 = vmatmul.mubr.bf16.gmra.mrb[0].mxu0 %v328
        %v661 = vpop.f32.mrb[0].mxu0
        %v662 = vadd.f32 0.0, %v661
        %v663 = vpop.f32.mrb[0].mxu0
        %v664 = vpop.f32.mrb[0].mxu0
        %v665 = vadd.f32 0.0, %v664
        %v666 = vpop.f32.mrb[0].mxu0
        %667 = vmatprep.mubr.bf16.mxu0 0
        %668 = vmatmul.mubr.bf16.gmra.mrb[0].mxu0 %v329
        %v669 = vpop.f32.mrb[0].mxu0
        %v670 = vadd.f32 0.0, %v669
        %v671 = vpop.f32.mrb[0].mxu0
        %v672 = vpop.f32.mrb[0].mxu0
        %v673 = vadd.f32 0.0, %v672
        %v674 = vpop.f32.mrb[0].mxu0
        %675 = vdwg.mxu0
        %v692 = vunpack.c.l.b16 %v499
        %v693 = vunpack.c.l.b16 %v500
        %v694 = vunpack.c.l.b16 %v501
        %v695 = vunpack.c.l.b16 %v502
        %v696 = vunpack.c.l.b16 %v503
        %v697 = vunpack.c.l.b16 %v504
        %v698 = vunpack.c.l.b16 %v505
        %v699 = vunpack.c.l.b16 %v506
        %v700 = vunpack.c.l.b16 %v507
        %v701 = vunpack.c.l.b16 %v508
        %v702 = vunpack.c.l.b16 %v509
        %v703 = vunpack.c.l.b16 %v510
        %v704 = vunpack.c.l.b16 %v511
        %v705 = vunpack.c.l.b16 %v512
        %v706 = vunpack.c.l.b16 %v513
        %v707 = vunpack.c.l.b16 %v514
        %v708 = vpack.c.b16 %v693, %v692
        %v709 = vpack.c.b16 %v695, %v694
        %v710 = vpack.c.b16 %v697, %v696
        %v711 = vpack.c.b16 %v699, %v698
        %v712 = vpack.c.b16 %v701, %v700
        %v713 = vpack.c.b16 %v703, %v702
        %v714 = vpack.c.b16 %v705, %v704
        %v715 = vpack.c.b16 %v707, %v706
        %724 = vmatprep.subr.bf16.mxu0 0
        %725 = vmatpush1.bf16.msra.mxu0 %v708
        %726 = vmatprep.subr.bf16.mxu0 0
        %727 = vmatpush1.bf16.msra.mxu0 %v709
        %728 = vmatprep.subr.bf16.mxu0 0
        %729 = vmatpush1.bf16.msra.mxu0 %v710
        %730 = vmatprep.subr.bf16.mxu0 0
        %731 = vmatpush1.bf16.msra.mxu0 %v711
        %732 = vmatprep.subr.bf16.mxu0 0
        %733 = vmatpush1.bf16.msra.mxu0 %v712
        %734 = vmatprep.subr.bf16.mxu0 0
        %735 = vmatpush1.bf16.msra.mxu0 %v713
        %736 = vmatprep.subr.bf16.mxu0 0
        %737 = vmatpush1.bf16.msra.mxu0 %v714
        %738 = vmatprep.subr.bf16.mxu0 0
        %739 = vmatpush1.bf16.msra.mxu0 %v715
        %740 = vmatprep.subr.bf16.mxu0 0
        %741 = vmatpush1.bf16.msra.mxu0 0
        %742 = vmatprep.subr.bf16.mxu0 0
        %743 = vmatpush1.bf16.msra.mxu0 0
        %744 = vmatprep.subr.bf16.mxu0 0
        %745 = vmatpush1.bf16.msra.mxu0 0
        %746 = vmatprep.subr.bf16.mxu0 0
        %747 = vmatpush1.bf16.msra.mxu0 0
        %748 = vmatprep.subr.bf16.mxu0 0
        %749 = vmatpush1.bf16.msra.mxu0 0
        %750 = vmatprep.subr.bf16.mxu0 0
        %751 = vmatpush1.bf16.msra.mxu0 0
        %752 = vmatprep.subr.bf16.mxu0 0
        %753 = vmatpush1.bf16.msra.mxu0 0
        %754 = vmatprep.subr.bf16.mxu0 0
        %755 = vmatpush1.bf16.msra.mxu0 0
        %756 = vmatprep.mubr.bf16.mxu0 0
        %757 = vmatmul.mubr.bf16.gmra.mrb[0].mxu0 %v491
        %v758 = vpop.f32.mrb[0].mxu0
        %v759 = vadd.f32 %v614, %v758
        %v760 = vpop.f32.mrb[0].mxu0
        %v761 = vpop.f32.mrb[0].mxu0
        %v762 = vadd.f32 %v617, %v761
        %v763 = vpop.f32.mrb[0].mxu0
        %764 = vmatprep.mubr.bf16.mxu0 0
        %765 = vmatmul.mubr.bf16.gmra.mrb[0].mxu0 %v492
        %v766 = vpop.f32.mrb[0].mxu0
        %v767 = vadd.f32 %v622, %v766
        %v768 = vpop.f32.mrb[0].mxu0
        %v769 = vpop.f32.mrb[0].mxu0
        %v770 = vadd.f32 %v625, %v769
        %v771 = vpop.f32.mrb[0].mxu0
        %772 = vmatprep.mubr.bf16.mxu0 0
        %773 = vmatmul.mubr.bf16.gmra.mrb[0].mxu0 %v493
        %v774 = vpop.f32.mrb[0].mxu0
        %v775 = vadd.f32 %v630, %v774
        %v776 = vpop.f32.mrb[0].mxu0
        %v777 = vpop.f32.mrb[0].mxu0
        %v778 = vadd.f32 %v633, %v777
        %v779 = vpop.f32.mrb[0].mxu0
        %780 = vmatprep.mubr.bf16.mxu0 0
        %781 = vmatmul.mubr.bf16.gmra.mrb[0].mxu0 %v494
        %v782 = vpop.f32.mrb[0].mxu0
        %v783 = vadd.f32 %v638, %v782
        %v784 = vpop.f32.mrb[0].mxu0
        %v785 = vpop.f32.mrb[0].mxu0
        %v786 = vadd.f32 %v641, %v785
        %v787 = vpop.f32.mrb[0].mxu0
        %788 = vmatprep.mubr.bf16.mxu0 0
        %789 = vmatmul.mubr.bf16.gmra.mrb[0].mxu0 %v495
        %v790 = vpop.f32.mrb[0].mxu0
        %v791 = vadd.f32 %v646, %v790
        %v792 = vpop.f32.mrb[0].mxu0
        %v793 = vpop.f32.mrb[0].mxu0
        %v794 = vadd.f32 %v649, %v793
        %v795 = vpop.f32.mrb[0].mxu0
        %796 = vmatprep.mubr.bf16.mxu0 0
        %797 = vmatmul.mubr.bf16.gmra.mrb[0].mxu0 %v496
        %v798 = vpop.f32.mrb[0].mxu0
        %v799 = vadd.f32 %v654, %v798
        %v800 = vpop.f32.mrb[0].mxu0
        %v801 = vpop.f32.mrb[0].mxu0
        %v802 = vadd.f32 %v657, %v801
        %v803 = vpop.f32.mrb[0].mxu0
        %804 = vmatprep.mubr.bf16.mxu0 0
        %805 = vmatmul.mubr.bf16.gmra.mrb[0].mxu0 %v497
        %v806 = vpop.f32.mrb[0].mxu0
        %v807 = vadd.f32 %v662, %v806
        %v808 = vpop.f32.mrb[0].mxu0
        %v809 = vpop.f32.mrb[0].mxu0
        %v810 = vadd.f32 %v665, %v809
        %v811 = vpop.f32.mrb[0].mxu0
        %812 = vmatprep.mubr.bf16.mxu0 0
        %813 = vmatmul.mubr.bf16.gmra.mrb[0].mxu0 %v498
        %v814 = vpop.f32.mrb[0].mxu0
        %v815 = vadd.f32 %v670, %v814
        %v816 = vpop.f32.mrb[0].mxu0
        %v817 = vpop.f32.mrb[0].mxu0
        %v818 = vadd.f32 %v673, %v817
        %v819 = vpop.f32.mrb[0].mxu0
        %820 = vdwg.mxu0
        %v821 = vld [vmem:[%s244] sm:$0x1]
        %v823 = vlaneseq
        %v824 = vshrl.u32 %v823, 7
        %v825 = vsub.s32 0, %v824
        %v826 = vrot.slane %v821, %v825
        %v828 = vadd.f32 %v759, %v826
        %v829 = vadd.f32 %v762, %v826
        %v830 = vadd.f32 %v767, %v826
        %v831 = vadd.f32 %v770, %v826
        %v832 = vadd.f32 %v775, %v826
        %v833 = vadd.f32 %v778, %v826
        %v834 = vadd.f32 %v783, %v826
        %v835 = vadd.f32 %v786, %v826
        %v836 = vadd.f32 %v791, %v826
        %v837 = vadd.f32 %v794, %v826
        %v838 = vadd.f32 %v799, %v826
        %v839 = vadd.f32 %v802, %v826
        %v840 = vadd.f32 %v807, %v826
        %v841 = vadd.f32 %v810, %v826
        %v842 = vadd.f32 %v815, %v826
        %v843 = vadd.f32 %v818, %v826
        %p844 = scmp.lt.s32.totalorder %s18, 2
        // Predicated region
        $region53: #{tpu_custom_call.1} parent=35 // pred_check
          %p845 = pneg %p844
        $region54: #{tpu_custom_call.1} parent=35 // pred_check_branch
          %847 = sbr.rel (%p845) target = $region56
        $region55: #{tpu_custom_call.1} parent=35 // pred_region
          %v848 = vmax.f32 %v828, 0.0
          %v849 = vmax.f32 %v829, 0.0
          %v850 = vmax.f32 %v830, 0.0
          %v851 = vmax.f32 %v831, 0.0
          %v852 = vmax.f32 %v832, 0.0
          %v853 = vmax.f32 %v833, 0.0
          %v854 = vmax.f32 %v834, 0.0
          %v855 = vmax.f32 %v835, 0.0
          %v856 = vmax.f32 %v836, 0.0
          %v857 = vmax.f32 %v837, 0.0
          %v858 = vmax.f32 %v838, 0.0
          %v859 = vmax.f32 %v839, 0.0
          %v860 = vmax.f32 %v840, 0.0
          %v861 = vmax.f32 %v841, 0.0
          %v862 = vmax.f32 %v842, 0.0
          %v863 = vmax.f32 %v843, 0.0
          %v864 = vpack.c.bf16 %v849, %v848
          %v865 = vpack.c.bf16 %v851, %v850
          %v866 = vpack.c.bf16 %v853, %v852
          %v867 = vpack.c.bf16 %v855, %v854
          %v868 = vpack.c.bf16 %v857, %v856
          %v869 = vpack.c.bf16 %v859, %v858
          %v870 = vpack.c.bf16 %v861, %v860
          %v871 = vpack.c.bf16 %v863, %v862
          %872 = vst [vmem:[#allocation2] sm:$0xff] %v864
          %873 = vst [vmem:[#allocation2 + $0x8] sm:$0xff] %v865
          %874 = vst [vmem:[#allocation2 + $0x10] sm:$0xff] %v866
          %875 = vst [vmem:[#allocation2 + $0x18] sm:$0xff] %v867
          %876 = vst [vmem:[#allocation2 + $0x20] sm:$0xff] %v868
          %877 = vst [vmem:[#allocation2 + $0x28] sm:$0xff] %v869
          %878 = vst [vmem:[#allocation2 + $0x30] sm:$0xff] %v870
          %879 = vst [vmem:[#allocation2 + $0x38] sm:$0xff] %v871
        $region56: #{tpu_custom_call.1} parent=35 // pred_fallthru
          _
        %p880 = scmp.eq.s32.totalorder %s18, 2
        // Predicated region
        $region57: #{tpu_custom_call.1} parent=35 // pred_check
          %p881 = pneg %p880
        $region58: #{tpu_custom_call.1} parent=35 // pred_check_branch
          %883 = sbr.rel (%p881) target = $region60
        $region59: #{tpu_custom_call.1} parent=35 // pred_region
          %884 = vst [vmem:[#allocation9] sm:$0xff] %v828
          %885 = vst [vmem:[#allocation9 + $0x8] sm:$0xff] %v829
          %886 = vst [vmem:[#allocation9 + $0x10] sm:$0xff] %v830
          %887 = vst [vmem:[#allocation9 + $0x18] sm:$0xff] %v831
          %888 = vst [vmem:[#allocation9 + $0x20] sm:$0xff] %v832
          %889 = vst [vmem:[#allocation9 + $0x28] sm:$0xff] %v833
          %890 = vst [vmem:[#allocation9 + $0x30] sm:$0xff] %v834
          %891 = vst [vmem:[#allocation9 + $0x38] sm:$0xff] %v835
          %892 = vst [vmem:[#allocation9 + $0x40] sm:$0xff] %v836
          %893 = vst [vmem:[#allocation9 + $0x48] sm:$0xff] %v837
          %894 = vst [vmem:[#allocation9 + $0x50] sm:$0xff] %v838
          %895 = vst [vmem:[#allocation9 + $0x58] sm:$0xff] %v839
          %896 = vst [vmem:[#allocation9 + $0x60] sm:$0xff] %v840
          %897 = vst [vmem:[#allocation9 + $0x68] sm:$0xff] %v841
          %898 = vst [vmem:[#allocation9 + $0x70] sm:$0xff] %v842
          %899 = vst [vmem:[#allocation9 + $0x78] sm:$0xff] %v843
        $region60: #{tpu_custom_call.1} parent=35 // pred_fallthru
          _
        // Predicated region
        $region61: #{tpu_custom_call.1} parent=35 // pred_check
          %p900 = pneg %p125
        $region62: #{tpu_custom_call.1} parent=35 // pred_check_branch
          %902 = sbr.rel (%p900) target = $region64
        $region63: #{tpu_custom_call.1} parent=35 // pred_region
          %s904 = ssub.s32 2048, 2048
          %905 = vsyncadd [#allocation5], %s904
          %s906 = sshll.u32 [#allocation9], 4
          %s907 = int_to_ptr.vmem [resolvable:$true] %s906
          %912 = dma.vmem_to_hbm [thread:$0]  %s907, 2048, %s4, [#allocation5], 128, 128, 8
        $region64: #{tpu_custom_call.1} parent=35 // pred_fallthru
          _
        // Predicated region
        $region65: #{tpu_custom_call.1} parent=35 // pred_check
          %p913 = pneg %p125
        $region66: #{tpu_custom_call.1} parent=35 // pred_check_branch
          %915 = sbr.rel (%p913) target = $region68
        $region67: #{tpu_custom_call.1} parent=35 // pred_region
          %916 = dma.done [#allocation5], 2048
        $region68: #{tpu_custom_call.1} parent=35 // pred_fallthru
          _
      $region36: #{tpu_custom_call.1} parent=5 // pred_fallthru
        _
      %p917 = scmp.le.s32.totalorder 2, %s13
      // Predicated region
      $region69: #{tpu_custom_call.1} parent=5 // pred_check
        %p918 = pneg %p917
      $region70: #{tpu_custom_call.1} parent=5 // pred_check_branch
        %920 = sbr.rel (%p918) target = $region72
      $region71: #{tpu_custom_call.1} parent=5 // pred_region
        %s921 = ssub.s32 %s13, 2
      $region72: #{tpu_custom_call.1} parent=5 // pred_fallthru
        _
    $region6: #{tpu_custom_call.1} parent=1 // loop_footer
      %s17 = sadd.s32 1, %s13
    $region7: #{tpu_custom_call.1} parent=1 // loop_footer_branch
      %12 = sbr.rel target = $region3
    $region8: #{tpu_custom_call.1} parent=1 // loop_exit
      _
    %922 = vsyncpa [#allocation4], 1
    %s923 = scalar_lea.sflag [#allocation4], 1
    %924 = vsyncpa %s923, 1
    %925 = vsyncpa [#allocation7], 1
    %926 = vsyncpa [#allocation5], 1
    %s927 = scalar_lea.sflag [#allocation5], 1
    %928 = vsyncpa %s927, 1

</llo_original>
